<compile_context>
chip_gen: v5e
topology: v5e:2x2
jax: 0.10.0
libtpu: 0.0.40
codegen_flags: <defaults>
</compile_context>

<pallas_src>
import numpy as np
import jax
import jax.numpy as jnp
from jax.experimental import pallas as pl
from jax.experimental.pallas import tpu as pltpu

_EPS = 1e-5
_PADT = 8   # top row pad (sublane tile) so interior row stores start aligned


# ----------------------------------------------------------------------------
# Fused kernel: ConvTranspose2d(k=2,s=2) -> [Conv3x3 + BN + ReLU] x 2
# ----------------------------------------------------------------------------
def _build_fused_kernel(H, Wq, CL):
    """H: low-res rows, Wq: low-res column-groups (W // fold), CL: lane width
    = fold * 4 * Cout (parity x folded-column x channel)."""
    HWq = H * Wq
    R = _PADT + H + 1          # fat-plane row extent: top pad + interior + halo

    def kernel(x_ref, wd_ref, bd_ref,
               w1_ref, s1_ref, t1_ref,
               w2_ref, s2_ref, t2_ref,
               o_ref, fp_ref):
        # fp_ref: (Wq+2, R, CL) column-folded parity-space fat plane.
        # Leading index p <-> low-res column group p-1 (p=0 / p=Wq+1: halo).
        # Sublane index r <-> low-res row r-_PADT (r=_PADT-1 / _PADT+H: halo).
        #
        # Zero ONLY the halo; interior is fully overwritten below.  Done every
        # grid step so it stays correct when the parallel batch axis is split
        # across TensorCores (scratch is per-core and persistent).
        fp_ref[0:1, :, :] = jnp.zeros((1, R, CL), jnp.float32)            # left
        fp_ref[Wq + 1:Wq + 2, :, :] = jnp.zeros((1, R, CL), jnp.float32)  # right
        fp_ref[1:Wq + 1, _PADT - 1:_PADT, :] = jnp.zeros((Wq, 1, CL), jnp.float32)
        fp_ref[1:Wq + 1, _PADT + H:_PADT + H + 1, :] = jnp.zeros((Wq, 1, CL),
                                                                 jnp.float32)

        # ---- ConvTranspose2d(k=2, stride=2): one matmul straight into the
        # column-folded parity layout (block-diagonal weight over the fold).
        y = jnp.dot(x_ref[0], wd_ref[...],
                    preferred_element_type=jnp.float32) + bd_ref[0]
        fp_ref[1:Wq + 1, _PADT:_PADT + H, :] = y.reshape(Wq, H, CL)

        def conv3x3_bn_relu(w_ref, s_ref, t_ref):
            # 9 shifted windows of the fat plane, one K=CL=128 matmul each.
            # Accumulate in registers; seed with the first tap (no zero-fill,
            # no VMEM accumulator round trips).
            acc = None
            for wq in range(3):                      # column-group tap
                for wr in range(3):                  # row tap
                    win = fp_ref[wq:wq + Wq,
                                 _PADT - 1 + wr:_PADT - 1 + wr + H, :]
                    part = jnp.dot(win.reshape(HWq, CL), w_ref[wr, wq],
                                   preferred_element_type=jnp.float32)
                    acc = part if acc is None else acc + part
            # folded conv bias + BatchNorm (eval) + ReLU
            return jnp.maximum(acc * s_ref[0] + t_ref[0], 0.0)

        # ---- conv1 + BN + ReLU -> becomes the next fat-plane interior
        o1 = conv3x3_bn_relu(w1_ref, s1_ref, t1_ref)
        fp_ref[1:Wq + 1, _PADT:_PADT + H, :] = o1.reshape(Wq, H, CL)

        # ---- conv2 + BN + ReLU -> written directly to the output block
        o_ref[0] = conv3x3_bn_relu(w2_ref, s2_ref, t2_ref)

    return kernel


# ----------------------------------------------------------------------------
# Parameter preparation (host side, done once)
# ----------------------------------------------------------------------------
def _augment_conv3x3_weight(w_hwio):
    """(3,3,C,C) HWIO -> (3,3,4C,4C) parity-augmented (numpy).  Block [wr, wc]
    maps input parity chunk (a, b) to output parity chunk (c, d) with tap
    W[dh, dw] iff dh = 2*wr + a - c - 1 and dw = 2*wc + b - d - 1 are in [0,2]."""
    w = np.asarray(w_hwio, dtype=np.float32)
    C = w.shape[2]
    waug = np.zeros((3, 3, 4 * C, 4 * C), np.float32)
    for wr in range(3):
        for wc in range(3):
            for a in range(2):
                for c in range(2):
                    dh = 2 * wr + a - c - 1
                    if not (0 <= dh <= 2):
                        continue
                    for b in range(2):
                        for d in range(2):
                            dw = 2 * wc + b - d - 1
                            if not (0 <= dw <= 2):
                                continue
                            waug[wr, wc,
                                 (2 * a + b) * C:(2 * a + b + 1) * C,
                                 (2 * c + d) * C:(2 * c + d + 1) * C] = w[dh, dw]
    return waug


def _fold_conv3x3_weight(w_hwio, fold):
    """Parity-augment, then fold `fold` adjacent low-res columns into the lane
    axis: (3,3,C,C) -> (3,3,fold*4C,fold*4C).  For column-group tap wq, the
    (qi -> qo) 4Cx4C block carries Waug[wr, wc] with wc = qi - qo + 1 + fold*(wq-1)."""
    waug = _augment_conv3x3_weight(w_hwio)
    C4 = waug.shape[2]
    wf = np.zeros((3, 3, fold * C4, fold * C4), np.float32)
    for wr in range(3):
        for wq in range(3):
            for qo in range(fold):
                for qi in range(fold):
                    wc = qi - qo + 1 + fold * (wq - 1)
                    if 0 <= wc <= 2:
                        wf[wr, wq,
                           qi * C4:(qi + 1) * C4,
                           qo * C4:(qo + 1) * C4] = waug[wr, wc]
    return jnp.asarray(wf)


def _fold_deconv_weight(deconv_w, fold):
    """ConvTranspose2d weight (Cin, C, 2, 2) -> block-diagonal (fold*Cin, fold*4C)
    acting on the column-folded input lanes and producing parity-chunk lanes."""
    w = np.asarray(deconv_w, np.float32)
    Cin, C = w.shape[0], w.shape[1]
    wflat = np.transpose(w, (0, 2, 3, 1)).reshape(Cin, 4 * C)   # cols = (a,b,co)
    wdq = np.zeros((fold * Cin, fold * 4 * C), np.float32)
    for q in range(fold):
        wdq[q * Cin:(q + 1) * Cin, q * 4 * C:(q + 1) * 4 * C] = wflat
    return jnp.asarray(wdq)


def init_params(key, in_channels, out_channels):
    """Deterministic synthetic parameters matching PyTorch default inits."""
    ks = jax.random.split(key, 6)
    C = out_channels
    bt = 1.0 / (in_channels * 2 * 2) ** 0.5
    bc = 1.0 / (out_channels * 3 * 3) ** 0.5
    return dict(
        # ConvTranspose2d: weight (Cin, Cout, 2, 2), bias (Cout,)
        deconv_w=jax.random.uniform(ks[0], (in_channels, C, 2, 2), jnp.float32, -bt, bt),
        deconv_b=jax.random.uniform(ks[1], (C,), jnp.float32, -bt, bt),
        # DoubleConv: two Conv2d(3x3, pad=1) weights in HWIO layout + biases
        conv1_w=jax.random.uniform(ks[2], (3, 3, C, C), jnp.float32, -bc, bc),
        conv1_b=jax.random.uniform(ks[3], (C,), jnp.float32, -bc, bc),
        conv2_w=jax.random.uniform(ks[4], (3, 3, C, C), jnp.float32, -bc, bc),
        conv2_b=jax.random.uniform(ks[5], (C,), jnp.float32, -bc, bc),
        # Fresh BatchNorm2d in eval mode
        bn1_gamma=jnp.ones((C,), jnp.float32), bn1_beta=jnp.zeros((C,), jnp.float32),
        bn1_mean=jnp.zeros((C,), jnp.float32), bn1_var=jnp.ones((C,), jnp.float32),
        bn2_gamma=jnp.ones((C,), jnp.float32), bn2_beta=jnp.zeros((C,), jnp.float32),
        bn2_mean=jnp.zeros((C,), jnp.float32), bn2_var=jnp.ones((C,), jnp.float32),
    )


def prepare_kernel_params(params, fold=4):
    """Fold BN(eval)+conv-bias into scale/shift, build column-folded augmented
    weights.  fold=4 gives a 128-wide lane dim for Cout=8 (v5e MXU width);
    fold=8 gives 256 lanes for v6e/v7x.  Runs once on host."""
    C = params["deconv_b"].shape[0]
    CL = 4 * fold * C
    scale1 = params["bn1_gamma"] / jnp.sqrt(params["bn1_var"] + _EPS)
    shift1 = params["bn1_beta"] + (params["conv1_b"] - params["bn1_mean"]) * scale1
    scale2 = params["bn2_gamma"] / jnp.sqrt(params["bn2_var"] + _EPS)
    shift2 = params["bn2_beta"] + (params["conv2_b"] - params["bn2_mean"]) * scale2
    return dict(
        in_channels=params["deconv_w"].shape[0],
        out_channels=C,
        fold=fold,
        wd=_fold_deconv_weight(params["deconv_w"], fold),
        bd=jnp.tile(params["deconv_b"], 4 * fold).reshape(1, CL),
        w1=_fold_conv3x3_weight(params["conv1_w"], fold),
        s1=jnp.tile(scale1, 4 * fold).reshape(1, CL),
        t1=jnp.tile(shift1, 4 * fold).reshape(1, CL),
        w2=_fold_conv3x3_weight(params["conv2_w"], fold),
        s2=jnp.tile(scale2, 4 * fold).reshape(1, CL),
        t2=jnp.tile(shift2, 4 * fold).reshape(1, CL),
    )


# ----------------------------------------------------------------------------
# Forward pass (public wrapper, NCHW in / NCHW out)
# ----------------------------------------------------------------------------
def conv_downscale_forward(x_nchw, kparams, downscale_factor=2):
    # TODO(synk): only downscale_factor == 2 (stride == kernel_size, the
    # non-overlapping transposed conv) is implemented; BatchNorm uses eval-mode
    # running stats.
    assert downscale_factor == 2, "kernel implements stride==kernel_size==2 only"
    B, Cin, H, W = x_nchw.shape
    assert Cin == kparams["in_channels"]
    fold = kparams["fold"]
    assert W % fold == 0, "W must be divisible by the column fold factor"
    C = kparams["out_channels"]
    CL = 4 * fold * C
    Wq = W // fold
    HWq = H * Wq
    CinF = fold * Cin

    # NCHW -> column-folded (B, Wq*H, fold*Cin): folded columns + channels on
    # lanes; (column-group, row) flattened onto sublanes (row index = J*H + i).
    xq = jnp.transpose(x_nchw, (0, 3, 2, 1)).astype(jnp.float32)       # (B,W,H,Cin)
    xq = xq.reshape(B, Wq, fold, H, Cin).transpose(0, 1, 3, 2, 4)
    xq = xq.reshape(B, HWq, CinF)

    const = lambda b: (0, 0)
    out = pl.pallas_call(
        _build_fused_kernel(H, Wq, CL),
        out_shape=jax.ShapeDtypeStruct((B, HWq, CL), jnp.float32),
        grid=(B,),
        in_specs=[
            pl.BlockSpec((1, HWq, CinF), lambda b: (b, 0, 0)),
            pl.BlockSpec((CinF, CL), const),
            pl.BlockSpec((1, CL), const),
            pl.BlockSpec((3, 3, CL, CL), lambda b: (0, 0, 0, 0)),
            pl.BlockSpec((1, CL), const),
            pl.BlockSpec((1, CL), const),
            pl.BlockSpec((3, 3, CL, CL), lambda b: (0, 0, 0, 0)),
            pl.BlockSpec((1, CL), const),
            pl.BlockSpec((1, CL), const),
        ],
        out_specs=pl.BlockSpec((1, HWq, CL), lambda b: (b, 0, 0)),
        scratch_shapes=[
            pltpu.VMEM((Wq + 2, _PADT + H + 1, CL), jnp.float32),   # fat plane
        ],
        compiler_params=pltpu.CompilerParams(
            dimension_semantics=("parallel",),
            vmem_limit_bytes=32 * 1024 * 1024,
        ),
    )(xq, kparams["wd"], kparams["bd"],
      kparams["w1"], kparams["s1"], kparams["t1"],
      kparams["w2"], kparams["s2"], kparams["t2"])

    # folded parity space -> NCHW:
    # out[b, J*H+i, ((q*2+c)*2+d)*C+co] == y[b, co, 2i+c, 2*(fold*J+q)+d]
    out = out.reshape(B, Wq, H, fold, 2, 2, C)
    out = jnp.transpose(out, (0, 6, 2, 4, 1, 3, 5))
    return out.reshape(B, C, 2 * H, 2 * W)


# ----------------------------------------------------------------------------
# Pure-JAX reference (PyTorch semantics) for a correctness check
# ----------------------------------------------------------------------------
def reference_forward(x_nchw, params):
    B, Cin, H, W = x_nchw.shape
    C = params["deconv_b"].shape[0]
    hi = jax.lax.Precision.HIGHEST
    # ConvTranspose2d(k=2, stride=2)
    t = jnp.einsum("ncij,cokl->noikjl", x_nchw, params["deconv_w"], precision=hi)
    y = t.reshape(B, C, 2 * H, 2 * W) + params["deconv_b"][None, :, None, None]

    def conv_bn_relu(z, w_hwio, bias, gamma, beta, mean, var):
        w_oihw = jnp.transpose(w_hwio, (3, 2, 0, 1))
        z = jax.lax.conv_general_dilated(
            z, w_oihw, window_strides=(1, 1), padding=((1, 1), (1, 1)),
            dimension_numbers=("NCHW", "OIHW", "NCHW"), precision=hi)
        z = z + bias[None, :, None, None]
        z = (z - mean[None, :, None, None]) / jnp.sqrt(var + _EPS)[None, :, None, None]
        z = z * gamma[None, :, None, None] + beta[None, :, None, None]
        return jnp.maximum(z, 0.0)

    y = conv_bn_relu(y, params["conv1_w"], params["conv1_b"],
                     params["bn1_gamma"], params["bn1_beta"],
                     params["bn1_mean"], params["bn1_var"])
    y = conv_bn_relu(y, params["conv2_w"], params["conv2_b"],
                     params["bn2_gamma"], params["bn2_beta"],
                     params["bn2_mean"], params["bn2_var"])
    return y


if __name__ == "__main__":
    key = jax.random.PRNGKey(0)
    in_channels, out_channels, downscale_factor = 4, 8, 2
    B, H, W = 2, 16, 16

    k_x, k_p = jax.random.split(key)
    x = jax.random.normal(k_x, (B, in_channels, H, W), jnp.float32)
    params = init_params(k_p, in_channels, out_channels)
    kparams = prepare_kernel_params(params, fold=4)   # 128-wide lane packing

    out = conv_downscale_forward(x, kparams, downscale_factor)
    out = jax.block_until_ready(out)

    H_out = (H - 1) * downscale_factor + 2   # ConvTranspose2d output size
    assert out.shape == (B, out_channels, H_out, H_out), out.shape
    assert out.dtype == jnp.float32

    ref = jax.block_until_ready(reference_forward(x, params))
    max_err = float(jnp.max(jnp.abs(out - ref)))
    assert max_err < 2e-3, f"mismatch vs reference: max abs err {max_err}"

    print("KERNEL_OK")
</pallas_src>

<mosaic_0001>
module attributes {stable_mosaic.version = 11 : i64} {
  func.func @kernel(%arg0: i32, %arg1: memref<1x64x16xf32, #tpu.memory_space<vmem>>, %arg2: memref<16x128xf32, #tpu.memory_space<vmem>>, %arg3: memref<1x128xf32, #tpu.memory_space<vmem>>, %arg4: memref<3x3x128x128xf32, #tpu.memory_space<vmem>>, %arg5: memref<1x128xf32, #tpu.memory_space<vmem>>, %arg6: memref<1x128xf32, #tpu.memory_space<vmem>>, %arg7: memref<3x3x128x128xf32, #tpu.memory_space<vmem>>, %arg8: memref<1x128xf32, #tpu.memory_space<vmem>>, %arg9: memref<1x128xf32, #tpu.memory_space<vmem>>, %arg10: memref<1x64x128xf32, #tpu.memory_space<vmem>>, %arg11: memref<6x25x128xf32, #tpu.memory_space<vmem>>) attributes {dimension_semantics = [#tpu.dimension_semantics<parallel>], iteration_bounds = array<i64: 2>, scalar_prefetch = 0 : i64, scratch_operands = 1 : i64, tpu.core_type = #tpu.core_type<tc>, window_params = [{transform_indices = @transform_0, window_bounds = array<i64: 1, 64, 16>}, {pipeline_mode = #tpu.pipeline_mode<synchronous>, transform_indices = @transform_1, window_bounds = array<i64: 16, 128>}, {pipeline_mode = #tpu.pipeline_mode<synchronous>, transform_indices = @transform_2, window_bounds = array<i64: 1, 128>}, {pipeline_mode = #tpu.pipeline_mode<synchronous>, transform_indices = @transform_3, window_bounds = array<i64: 3, 3, 128, 128>}, {pipeline_mode = #tpu.pipeline_mode<synchronous>, transform_indices = @transform_4, window_bounds = array<i64: 1, 128>}, {pipeline_mode = #tpu.pipeline_mode<synchronous>, transform_indices = @transform_5, window_bounds = array<i64: 1, 128>}, {pipeline_mode = #tpu.pipeline_mode<synchronous>, transform_indices = @transform_6, window_bounds = array<i64: 3, 3, 128, 128>}, {pipeline_mode = #tpu.pipeline_mode<synchronous>, transform_indices = @transform_7, window_bounds = array<i64: 1, 128>}, {pipeline_mode = #tpu.pipeline_mode<synchronous>, transform_indices = @transform_8, window_bounds = array<i64: 1, 128>}, {transform_indices = @transform_9, window_bounds = array<i64: 1, 64, 128>}]} {
    %cst = arith.constant 0.000000e+00 : f32
    %0 = vector.broadcast %cst : f32 to vector<1x25x128xf32>
    %c0 = arith.constant 0 : index
    %c0_0 = arith.constant 0 : index
    %c0_1 = arith.constant 0 : index
    %1 = vector.load %arg11[%c0, %c0_0, %c0_1] : memref<6x25x128xf32, #tpu.memory_space<vmem>>, vector<1x25x128xf32>
    tpu.vector_store %arg11[%c0, %c0_0, %c0_1], %0 {strides = array<i32>} : memref<6x25x128xf32, #tpu.memory_space<vmem>>, vector<1x25x128xf32>,
    %cst_2 = arith.constant 0.000000e+00 : f32
    %2 = vector.broadcast %cst_2 : f32 to vector<1x25x128xf32>
    %c5 = arith.constant 5 : index
    %c0_3 = arith.constant 0 : index
    %c0_4 = arith.constant 0 : index
    %3 = vector.load %arg11[%c5, %c0_3, %c0_4] : memref<6x25x128xf32, #tpu.memory_space<vmem>>, vector<1x25x128xf32>
    tpu.vector_store %arg11[%c5, %c0_3, %c0_4], %2 {strides = array<i32>} : memref<6x25x128xf32, #tpu.memory_space<vmem>>, vector<1x25x128xf32>,
    %cst_5 = arith.constant 0.000000e+00 : f32
    %4 = vector.broadcast %cst_5 : f32 to vector<4x1x128xf32>
    %c1 = arith.constant 1 : index
    %c7 = arith.constant 7 : index
    %c0_6 = arith.constant 0 : index
    %5 = vector.load %arg11[%c1, %c7, %c0_6] : memref<6x25x128xf32, #tpu.memory_space<vmem>>, vector<4x1x128xf32>
    tpu.vector_store %arg11[%c1, %c7, %c0_6], %4 {strides = array<i32>} : memref<6x25x128xf32, #tpu.memory_space<vmem>>, vector<4x1x128xf32>,
    %cst_7 = arith.constant 0.000000e+00 : f32
    %6 = vector.broadcast %cst_7 : f32 to vector<4x1x128xf32>
    %c1_8 = arith.constant 1 : index
    %c24 = arith.constant 24 : index
    %c0_9 = arith.constant 0 : index
    %7 = vector.load %arg11[%c1_8, %c24, %c0_9] : memref<6x25x128xf32, #tpu.memory_space<vmem>>, vector<4x1x128xf32>
    tpu.vector_store %arg11[%c1_8, %c24, %c0_9], %6 {strides = array<i32>} : memref<6x25x128xf32, #tpu.memory_space<vmem>>, vector<4x1x128xf32>,
    %c0_10 = arith.constant 0 : index
    %c0_11 = arith.constant 0 : index
    %c0_12 = arith.constant 0 : index
    %8 = vector.load %arg1[%c0_10, %c0_11, %c0_12] : memref<1x64x16xf32, #tpu.memory_space<vmem>>, vector<1x64x16xf32>
    %9 = vector.shape_cast %8 : vector<1x64x16xf32> to vector<64x16xf32>
    %c0_13 = arith.constant 0 : index
    %c0_14 = arith.constant 0 : index
    %10 = vector.load %arg2[%c0_13, %c0_14] : memref<16x128xf32, #tpu.memory_space<vmem>>, vector<16x128xf32>
    %cst_15 = arith.constant dense<0.000000e+00> : vector<64x128xf32>
    %11 = tpu.matmul %9, %10, %cst_15 {dimension_numbers = #tpu.dot_dimension_numbers<[1], [0], [0], [1], [0, 0, 1, 1], [], []>} : vector<64x16xf32>, vector<16x128xf32>, vector<64x128xf32> -> vector<64x128xf32>
    %c0_16 = arith.constant 0 : index
    %c0_17 = arith.constant 0 : index
    %12 = vector.load %arg3[%c0_16, %c0_17] : memref<1x128xf32, #tpu.memory_space<vmem>>, vector<1x128xf32>
    %13 = vector.shape_cast %12 : vector<1x128xf32> to vector<128xf32>
    %14 = vector.shape_cast %13 : vector<128xf32> to vector<1x128xf32>
    %15 = vector.broadcast %14 : vector<1x128xf32> to vector<64x128xf32>
    %16 = arith.addf %11, %15 : vector<64x128xf32>
    %17 = vector.shape_cast %16 : vector<64x128xf32> to vector<4x16x128xf32>
    %c1_18 = arith.constant 1 : index
    %c8 = arith.constant 8 : index
    %c0_19 = arith.constant 0 : index
    %18 = vector.load %arg11[%c1_18, %c8, %c0_19] : memref<6x25x128xf32, #tpu.memory_space<vmem>>, vector<4x16x128xf32>
    tpu.vector_store %arg11[%c1_18, %c8, %c0_19], %17 {strides = array<i32>} : memref<6x25x128xf32, #tpu.memory_space<vmem>>, vector<4x16x128xf32>,
    %c0_20 = arith.constant 0 : index
    %c7_21 = arith.constant 7 : index
    %c0_22 = arith.constant 0 : index
    %19 = vector.load %arg11[%c0_20, %c7_21, %c0_22] : memref<6x25x128xf32, #tpu.memory_space<vmem>>, vector<4x16x128xf32>
    %20 = vector.shape_cast %19 : vector<4x16x128xf32> to vector<64x128xf32>
    %c0_23 = arith.constant 0 : index
    %c0_24 = arith.constant 0 : index
    %c0_25 = arith.constant 0 : index
    %c0_26 = arith.constant 0 : index
    %21 = vector.load %arg4[%c0_23, %c0_24, %c0_25, %c0_26] : memref<3x3x128x128xf32, #tpu.memory_space<vmem>>, vector<1x1x128x128xf32>
    %22 = vector.shape_cast %21 : vector<1x1x128x128xf32> to vector<128x128xf32>
    %cst_27 = arith.constant dense<0.000000e+00> : vector<64x128xf32>
    %23 = tpu.matmul %20, %22, %cst_27 {dimension_numbers = #tpu.dot_dimension_numbers<[1], [0], [0], [1], [0, 0, 1, 1], [], []>} : vector<64x128xf32>, vector<128x128xf32>, vector<64x128xf32> -> vector<64x128xf32>
    %c0_28 = arith.constant 0 : index
    %c8_29 = arith.constant 8 : index
    %c0_30 = arith.constant 0 : index
    %24 = vector.load %arg11[%c0_28, %c8_29, %c0_30] : memref<6x25x128xf32, #tpu.memory_space<vmem>>, vector<4x16x128xf32>
    %25 = vector.shape_cast %24 : vector<4x16x128xf32> to vector<64x128xf32>
    %c1_31 = arith.constant 1 : index
    %c0_32 = arith.constant 0 : index
    %c0_33 = arith.constant 0 : index
    %c0_34 = arith.constant 0 : index
    %26 = vector.load %arg4[%c1_31, %c0_32, %c0_33, %c0_34] : memref<3x3x128x128xf32, #tpu.memory_space<vmem>>, vector<1x1x128x128xf32>
    %27 = vector.shape_cast %26 : vector<1x1x128x128xf32> to vector<128x128xf32>
    %cst_35 = arith.constant dense<0.000000e+00> : vector<64x128xf32>
    %28 = tpu.matmul %25, %27, %cst_35 {dimension_numbers = #tpu.dot_dimension_numbers<[1], [0], [0], [1], [0, 0, 1, 1], [], []>} : vector<64x128xf32>, vector<128x128xf32>, vector<64x128xf32> -> vector<64x128xf32>
    %29 = arith.addf %23, %28 : vector<64x128xf32>
    %c0_36 = arith.constant 0 : index
    %c9 = arith.constant 9 : index
    %c0_37 = arith.constant 0 : index
    %30 = vector.load %arg11[%c0_36, %c9, %c0_37] : memref<6x25x128xf32, #tpu.memory_space<vmem>>, vector<4x16x128xf32>
    %31 = vector.shape_cast %30 : vector<4x16x128xf32> to vector<64x128xf32>
    %c2 = arith.constant 2 : index
    %c0_38 = arith.constant 0 : index
    %c0_39 = arith.constant 0 : index
    %c0_40 = arith.constant 0 : index
    %32 = vector.load %arg4[%c2, %c0_38, %c0_39, %c0_40] : memref<3x3x128x128xf32, #tpu.memory_space<vmem>>, vector<1x1x128x128xf32>
    %33 = vector.shape_cast %32 : vector<1x1x128x128xf32> to vector<128x128xf32>
    %cst_41 = arith.constant dense<0.000000e+00> : vector<64x128xf32>
    %34 = tpu.matmul %31, %33, %cst_41 {dimension_numbers = #tpu.dot_dimension_numbers<[1], [0], [0], [1], [0, 0, 1, 1], [], []>} : vector<64x128xf32>, vector<128x128xf32>, vector<64x128xf32> -> vector<64x128xf32>
    %35 = arith.addf %29, %34 : vector<64x128xf32>
    %c1_42 = arith.constant 1 : index
    %c7_43 = arith.constant 7 : index
    %c0_44 = arith.constant 0 : index
    %36 = vector.load %arg11[%c1_42, %c7_43, %c0_44] : memref<6x25x128xf32, #tpu.memory_space<vmem>>, vector<4x16x128xf32>
    %37 = vector.shape_cast %36 : vector<4x16x128xf32> to vector<64x128xf32>
    %c0_45 = arith.constant 0 : index
    %c1_46 = arith.constant 1 : index
    %c0_47 = arith.constant 0 : index
    %c0_48 = arith.constant 0 : index
    %38 = vector.load %arg4[%c0_45, %c1_46, %c0_47, %c0_48] : memref<3x3x128x128xf32, #tpu.memory_space<vmem>>, vector<1x1x128x128xf32>
    %39 = vector.shape_cast %38 : vector<1x1x128x128xf32> to vector<128x128xf32>
    %cst_49 = arith.constant dense<0.000000e+00> : vector<64x128xf32>
    %40 = tpu.matmul %37, %39, %cst_49 {dimension_numbers = #tpu.dot_dimension_numbers<[1], [0], [0], [1], [0, 0, 1, 1], [], []>} : vector<64x128xf32>, vector<128x128xf32>, vector<64x128xf32> -> vector<64x128xf32>
    %41 = arith.addf %35, %40 : vector<64x128xf32>
    %c1_50 = arith.constant 1 : index
    %c8_51 = arith.constant 8 : index
    %c0_52 = arith.constant 0 : index
    %42 = vector.load %arg11[%c1_50, %c8_51, %c0_52] : memref<6x25x128xf32, #tpu.memory_space<vmem>>, vector<4x16x128xf32>
    %43 = vector.shape_cast %42 : vector<4x16x128xf32> to vector<64x128xf32>
    %c1_53 = arith.constant 1 : index
    %c1_54 = arith.constant 1 : index
    %c0_55 = arith.constant 0 : index
    %c0_56 = arith.constant 0 : index
    %44 = vector.load %arg4[%c1_53, %c1_54, %c0_55, %c0_56] : memref<3x3x128x128xf32, #tpu.memory_space<vmem>>, vector<1x1x128x128xf32>
    %45 = vector.shape_cast %44 : vector<1x1x128x128xf32> to vector<128x128xf32>
    %cst_57 = arith.constant dense<0.000000e+00> : vector<64x128xf32>
    %46 = tpu.matmul %43, %45, %cst_57 {dimension_numbers = #tpu.dot_dimension_numbers<[1], [0], [0], [1], [0, 0, 1, 1], [], []>} : vector<64x128xf32>, vector<128x128xf32>, vector<64x128xf32> -> vector<64x128xf32>
    %47 = arith.addf %41, %46 : vector<64x128xf32>
    %c1_58 = arith.constant 1 : index
    %c9_59 = arith.constant 9 : index
    %c0_60 = arith.constant 0 : index
    %48 = vector.load %arg11[%c1_58, %c9_59, %c0_60] : memref<6x25x128xf32, #tpu.memory_space<vmem>>, vector<4x16x128xf32>
    %49 = vector.shape_cast %48 : vector<4x16x128xf32> to vector<64x128xf32>
    %c2_61 = arith.constant 2 : index
    %c1_62 = arith.constant 1 : index
    %c0_63 = arith.constant 0 : index
    %c0_64 = arith.constant 0 : index
    %50 = vector.load %arg4[%c2_61, %c1_62, %c0_63, %c0_64] : memref<3x3x128x128xf32, #tpu.memory_space<vmem>>, vector<1x1x128x128xf32>
    %51 = vector.shape_cast %50 : vector<1x1x128x128xf32> to vector<128x128xf32>
    %cst_65 = arith.constant dense<0.000000e+00> : vector<64x128xf32>
    %52 = tpu.matmul %49, %51, %cst_65 {dimension_numbers = #tpu.dot_dimension_numbers<[1], [0], [0], [1], [0, 0, 1, 1], [], []>} : vector<64x128xf32>, vector<128x128xf32>, vector<64x128xf32> -> vector<64x128xf32>
    %53 = arith.addf %47, %52 : vector<64x128xf32>
    %c2_66 = arith.constant 2 : index
    %c7_67 = arith.constant 7 : index
    %c0_68 = arith.constant 0 : index
    %54 = vector.load %arg11[%c2_66, %c7_67, %c0_68] : memref<6x25x128xf32, #tpu.memory_space<vmem>>, vector<4x16x128xf32>
    %55 = vector.shape_cast %54 : vector<4x16x128xf32> to vector<64x128xf32>
    %c0_69 = arith.constant 0 : index
    %c2_70 = arith.constant 2 : index
    %c0_71 = arith.constant 0 : index
    %c0_72 = arith.constant 0 : index
    %56 = vector.load %arg4[%c0_69, %c2_70, %c0_71, %c0_72] : memref<3x3x128x128xf32, #tpu.memory_space<vmem>>, vector<1x1x128x128xf32>
    %57 = vector.shape_cast %56 : vector<1x1x128x128xf32> to vector<128x128xf32>
    %cst_73 = arith.constant dense<0.000000e+00> : vector<64x128xf32>
    %58 = tpu.matmul %55, %57, %cst_73 {dimension_numbers = #tpu.dot_dimension_numbers<[1], [0], [0], [1], [0, 0, 1, 1], [], []>} : vector<64x128xf32>, vector<128x128xf32>, vector<64x128xf32> -> vector<64x128xf32>
    %59 = arith.addf %53, %58 : vector<64x128xf32>
    %c2_74 = arith.constant 2 : index
    %c8_75 = arith.constant 8 : index
    %c0_76 = arith.constant 0 : index
    %60 = vector.load %arg11[%c2_74, %c8_75, %c0_76] : memref<6x25x128xf32, #tpu.memory_space<vmem>>, vector<4x16x128xf32>
    %61 = vector.shape_cast %60 : vector<4x16x128xf32> to vector<64x128xf32>
    %c1_77 = arith.constant 1 : index
    %c2_78 = arith.constant 2 : index
    %c0_79 = arith.constant 0 : index
    %c0_80 = arith.constant 0 : index
    %62 = vector.load %arg4[%c1_77, %c2_78, %c0_79, %c0_80] : memref<3x3x128x128xf32, #tpu.memory_space<vmem>>, vector<1x1x128x128xf32>
    %63 = vector.shape_cast %62 : vector<1x1x128x128xf32> to vector<128x128xf32>
    %cst_81 = arith.constant dense<0.000000e+00> : vector<64x128xf32>
    %64 = tpu.matmul %61, %63, %cst_81 {dimension_numbers = #tpu.dot_dimension_numbers<[1], [0], [0], [1], [0, 0, 1, 1], [], []>} : vector<64x128xf32>, vector<128x128xf32>, vector<64x128xf32> -> vector<64x128xf32>
    %65 = arith.addf %59, %64 : vector<64x128xf32>
    %c2_82 = arith.constant 2 : index
    %c9_83 = arith.constant 9 : index
    %c0_84 = arith.constant 0 : index
    %66 = vector.load %arg11[%c2_82, %c9_83, %c0_84] : memref<6x25x128xf32, #tpu.memory_space<vmem>>, vector<4x16x128xf32>
    %67 = vector.shape_cast %66 : vector<4x16x128xf32> to vector<64x128xf32>
    %c2_85 = arith.constant 2 : index
    %c2_86 = arith.constant 2 : index
    %c0_87 = arith.constant 0 : index
    %c0_88 = arith.constant 0 : index
    %68 = vector.load %arg4[%c2_85, %c2_86, %c0_87, %c0_88] : memref<3x3x128x128xf32, #tpu.memory_space<vmem>>, vector<1x1x128x128xf32>
    %69 = vector.shape_cast %68 : vector<1x1x128x128xf32> to vector<128x128xf32>
    %cst_89 = arith.constant dense<0.000000e+00> : vector<64x128xf32>
    %70 = tpu.matmul %67, %69, %cst_89 {dimension_numbers = #tpu.dot_dimension_numbers<[1], [0], [0], [1], [0, 0, 1, 1], [], []>} : vector<64x128xf32>, vector<128x128xf32>, vector<64x128xf32> -> vector<64x128xf32>
    %71 = arith.addf %65, %70 : vector<64x128xf32>
    %c0_90 = arith.constant 0 : index
    %c0_91 = arith.constant 0 : index
    %72 = vector.load %arg5[%c0_90, %c0_91] : memref<1x128xf32, #tpu.memory_space<vmem>>, vector<1x128xf32>
    %73 = vector.shape_cast %72 : vector<1x128xf32> to vector<128xf32>
    %74 = vector.shape_cast %73 : vector<128xf32> to vector<1x128xf32>
    %75 = vector.broadcast %74 : vector<1x128xf32> to vector<64x128xf32>
    %76 = arith.mulf %71, %75 : vector<64x128xf32>
    %c0_92 = arith.constant 0 : index
    %c0_93 = arith.constant 0 : index
    %77 = vector.load %arg6[%c0_92, %c0_93] : memref<1x128xf32, #tpu.memory_space<vmem>>, vector<1x128xf32>
    %78 = vector.shape_cast %77 : vector<1x128xf32> to vector<128xf32>
    %79 = vector.shape_cast %78 : vector<128xf32> to vector<1x128xf32>
    %80 = vector.broadcast %79 : vector<1x128xf32> to vector<64x128xf32>
    %81 = arith.addf %76, %80 : vector<64x128xf32>
    %cst_94 = arith.constant 0.000000e+00 : f32
    %82 = vector.broadcast %cst_94 : f32 to vector<64x128xf32>
    %83 = arith.maximumf %81, %82 : vector<64x128xf32>
    %84 = vector.shape_cast %83 : vector<64x128xf32> to vector<4x16x128xf32>
    %c1_95 = arith.constant 1 : index
    %c8_96 = arith.constant 8 : index
    %c0_97 = arith.constant 0 : index
    %85 = vector.load %arg11[%c1_95, %c8_96, %c0_97] : memref<6x25x128xf32, #tpu.memory_space<vmem>>, vector<4x16x128xf32>
    tpu.vector_store %arg11[%c1_95, %c8_96, %c0_97], %84 {strides = array<i32>} : memref<6x25x128xf32, #tpu.memory_space<vmem>>, vector<4x16x128xf32>,
    %c0_98 = arith.constant 0 : index
    %c7_99 = arith.constant 7 : index
    %c0_100 = arith.constant 0 : index
    %86 = vector.load %arg11[%c0_98, %c7_99, %c0_100] : memref<6x25x128xf32, #tpu.memory_space<vmem>>, vector<4x16x128xf32>
    %87 = vector.shape_cast %86 : vector<4x16x128xf32> to vector<64x128xf32>
    %c0_101 = arith.constant 0 : index
    %c0_102 = arith.constant 0 : index
    %c0_103 = arith.constant 0 : index
    %c0_104 = arith.constant 0 : index
    %88 = vector.load %arg7[%c0_101, %c0_102, %c0_103, %c0_104] : memref<3x3x128x128xf32, #tpu.memory_space<vmem>>, vector<1x1x128x128xf32>
    %89 = vector.shape_cast %88 : vector<1x1x128x128xf32> to vector<128x128xf32>
    %cst_105 = arith.constant dense<0.000000e+00> : vector<64x128xf32>
    %90 = tpu.matmul %87, %89, %cst_105 {dimension_numbers = #tpu.dot_dimension_numbers<[1], [0], [0], [1], [0, 0, 1, 1], [], []>} : vector<64x128xf32>, vector<128x128xf32>, vector<64x128xf32> -> vector<64x128xf32>
    %c0_106 = arith.constant 0 : index
    %c8_107 = arith.constant 8 : index
    %c0_108 = arith.constant 0 : index
    %91 = vector.load %arg11[%c0_106, %c8_107, %c0_108] : memref<6x25x128xf32, #tpu.memory_space<vmem>>, vector<4x16x128xf32>
    %92 = vector.shape_cast %91 : vector<4x16x128xf32> to vector<64x128xf32>
    %c1_109 = arith.constant 1 : index
    %c0_110 = arith.constant 0 : index
    %c0_111 = arith.constant 0 : index
    %c0_112 = arith.constant 0 : index
    %93 = vector.load %arg7[%c1_109, %c0_110, %c0_111, %c0_112] : memref<3x3x128x128xf32, #tpu.memory_space<vmem>>, vector<1x1x128x128xf32>
    %94 = vector.shape_cast %93 : vector<1x1x128x128xf32> to vector<128x128xf32>
    %cst_113 = arith.constant dense<0.000000e+00> : vector<64x128xf32>
    %95 = tpu.matmul %92, %94, %cst_113 {dimension_numbers = #tpu.dot_dimension_numbers<[1], [0], [0], [1], [0, 0, 1, 1], [], []>} : vector<64x128xf32>, vector<128x128xf32>, vector<64x128xf32> -> vector<64x128xf32>
    %96 = arith.addf %90, %95 : vector<64x128xf32>
    %c0_114 = arith.constant 0 : index
    %c9_115 = arith.constant 9 : index
    %c0_116 = arith.constant 0 : index
    %97 = vector.load %arg11[%c0_114, %c9_115, %c0_116] : memref<6x25x128xf32, #tpu.memory_space<vmem>>, vector<4x16x128xf32>
    %98 = vector.shape_cast %97 : vector<4x16x128xf32> to vector<64x128xf32>
    %c2_117 = arith.constant 2 : index
    %c0_118 = arith.constant 0 : index
    %c0_119 = arith.constant 0 : index
    %c0_120 = arith.constant 0 : index
    %99 = vector.load %arg7[%c2_117, %c0_118, %c0_119, %c0_120] : memref<3x3x128x128xf32, #tpu.memory_space<vmem>>, vector<1x1x128x128xf32>
    %100 = vector.shape_cast %99 : vector<1x1x128x128xf32> to vector<128x128xf32>
    %cst_121 = arith.constant dense<0.000000e+00> : vector<64x128xf32>
    %101 = tpu.matmul %98, %100, %cst_121 {dimension_numbers = #tpu.dot_dimension_numbers<[1], [0], [0], [1], [0, 0, 1, 1], [], []>} : vector<64x128xf32>, vector<128x128xf32>, vector<64x128xf32> -> vector<64x128xf32>
    %102 = arith.addf %96, %101 : vector<64x128xf32>
    %c1_122 = arith.constant 1 : index
    %c7_123 = arith.constant 7 : index
    %c0_124 = arith.constant 0 : index
    %103 = vector.load %arg11[%c1_122, %c7_123, %c0_124] : memref<6x25x128xf32, #tpu.memory_space<vmem>>, vector<4x16x128xf32>
    %104 = vector.shape_cast %103 : vector<4x16x128xf32> to vector<64x128xf32>
    %c0_125 = arith.constant 0 : index
    %c1_126 = arith.constant 1 : index
    %c0_127 = arith.constant 0 : index
    %c0_128 = arith.constant 0 : index
    %105 = vector.load %arg7[%c0_125, %c1_126, %c0_127, %c0_128] : memref<3x3x128x128xf32, #tpu.memory_space<vmem>>, vector<1x1x128x128xf32>
    %106 = vector.shape_cast %105 : vector<1x1x128x128xf32> to vector<128x128xf32>
    %cst_129 = arith.constant dense<0.000000e+00> : vector<64x128xf32>
    %107 = tpu.matmul %104, %106, %cst_129 {dimension_numbers = #tpu.dot_dimension_numbers<[1], [0], [0], [1], [0, 0, 1, 1], [], []>} : vector<64x128xf32>, vector<128x128xf32>, vector<64x128xf32> -> vector<64x128xf32>
    %108 = arith.addf %102, %107 : vector<64x128xf32>
    %c1_130 = arith.constant 1 : index
    %c8_131 = arith.constant 8 : index
    %c0_132 = arith.constant 0 : index
    %109 = vector.load %arg11[%c1_130, %c8_131, %c0_132] : memref<6x25x128xf32, #tpu.memory_space<vmem>>, vector<4x16x128xf32>
    %110 = vector.shape_cast %109 : vector<4x16x128xf32> to vector<64x128xf32>
    %c1_133 = arith.constant 1 : index
    %c1_134 = arith.constant 1 : index
    %c0_135 = arith.constant 0 : index
    %c0_136 = arith.constant 0 : index
    %111 = vector.load %arg7[%c1_133, %c1_134, %c0_135, %c0_136] : memref<3x3x128x128xf32, #tpu.memory_space<vmem>>, vector<1x1x128x128xf32>
    %112 = vector.shape_cast %111 : vector<1x1x128x128xf32> to vector<128x128xf32>
    %cst_137 = arith.constant dense<0.000000e+00> : vector<64x128xf32>
    %113 = tpu.matmul %110, %112, %cst_137 {dimension_numbers = #tpu.dot_dimension_numbers<[1], [0], [0], [1], [0, 0, 1, 1], [], []>} : vector<64x128xf32>, vector<128x128xf32>, vector<64x128xf32> -> vector<64x128xf32>
    %114 = arith.addf %108, %113 : vector<64x128xf32>
    %c1_138 = arith.constant 1 : index
    %c9_139 = arith.constant 9 : index
    %c0_140 = arith.constant 0 : index
    %115 = vector.load %arg11[%c1_138, %c9_139, %c0_140] : memref<6x25x128xf32, #tpu.memory_space<vmem>>, vector<4x16x128xf32>
    %116 = vector.shape_cast %115 : vector<4x16x128xf32> to vector<64x128xf32>
    %c2_141 = arith.constant 2 : index
    %c1_142 = arith.constant 1 : index
    %c0_143 = arith.constant 0 : index
    %c0_144 = arith.constant 0 : index
    %117 = vector.load %arg7[%c2_141, %c1_142, %c0_143, %c0_144] : memref<3x3x128x128xf32, #tpu.memory_space<vmem>>, vector<1x1x128x128xf32>
    %118 = vector.shape_cast %117 : vector<1x1x128x128xf32> to vector<128x128xf32>
    %cst_145 = arith.constant dense<0.000000e+00> : vector<64x128xf32>
    %119 = tpu.matmul %116, %118, %cst_145 {dimension_numbers = #tpu.dot_dimension_numbers<[1], [0], [0], [1], [0, 0, 1, 1], [], []>} : vector<64x128xf32>, vector<128x128xf32>, vector<64x128xf32> -> vector<64x128xf32>
    %120 = arith.addf %114, %119 : vector<64x128xf32>
    %c2_146 = arith.constant 2 : index
    %c7_147 = arith.constant 7 : index
    %c0_148 = arith.constant 0 : index
    %121 = vector.load %arg11[%c2_146, %c7_147, %c0_148] : memref<6x25x128xf32, #tpu.memory_space<vmem>>, vector<4x16x128xf32>
    %122 = vector.shape_cast %121 : vector<4x16x128xf32> to vector<64x128xf32>
    %c0_149 = arith.constant 0 : index
    %c2_150 = arith.constant 2 : index
    %c0_151 = arith.constant 0 : index
    %c0_152 = arith.constant 0 : index
    %123 = vector.load %arg7[%c0_149, %c2_150, %c0_151, %c0_152] : memref<3x3x128x128xf32, #tpu.memory_space<vmem>>, vector<1x1x128x128xf32>
    %124 = vector.shape_cast %123 : vector<1x1x128x128xf32> to vector<128x128xf32>
    %cst_153 = arith.constant dense<0.000000e+00> : vector<64x128xf32>
    %125 = tpu.matmul %122, %124, %cst_153 {dimension_numbers = #tpu.dot_dimension_numbers<[1], [0], [0], [1], [0, 0, 1, 1], [], []>} : vector<64x128xf32>, vector<128x128xf32>, vector<64x128xf32> -> vector<64x128xf32>
    %126 = arith.addf %120, %125 : vector<64x128xf32>
    %c2_154 = arith.constant 2 : index
    %c8_155 = arith.constant 8 : index
    %c0_156 = arith.constant 0 : index
    %127 = vector.load %arg11[%c2_154, %c8_155, %c0_156] : memref<6x25x128xf32, #tpu.memory_space<vmem>>, vector<4x16x128xf32>
    %128 = vector.shape_cast %127 : vector<4x16x128xf32> to vector<64x128xf32>
    %c1_157 = arith.constant 1 : index
    %c2_158 = arith.constant 2 : index
    %c0_159 = arith.constant 0 : index
    %c0_160 = arith.constant 0 : index
    %129 = vector.load %arg7[%c1_157, %c2_158, %c0_159, %c0_160] : memref<3x3x128x128xf32, #tpu.memory_space<vmem>>, vector<1x1x128x128xf32>
    %130 = vector.shape_cast %129 : vector<1x1x128x128xf32> to vector<128x128xf32>
    %cst_161 = arith.constant dense<0.000000e+00> : vector<64x128xf32>
    %131 = tpu.matmul %128, %130, %cst_161 {dimension_numbers = #tpu.dot_dimension_numbers<[1], [0], [0], [1], [0, 0, 1, 1], [], []>} : vector<64x128xf32>, vector<128x128xf32>, vector<64x128xf32> -> vector<64x128xf32>
    %132 = arith.addf %126, %131 : vector<64x128xf32>
    %c2_162 = arith.constant 2 : index
    %c9_163 = arith.constant 9 : index
    %c0_164 = arith.constant 0 : index
    %133 = vector.load %arg11[%c2_162, %c9_163, %c0_164] : memref<6x25x128xf32, #tpu.memory_space<vmem>>, vector<4x16x128xf32>
    %134 = vector.shape_cast %133 : vector<4x16x128xf32> to vector<64x128xf32>
    %c2_165 = arith.constant 2 : index
    %c2_166 = arith.constant 2 : index
    %c0_167 = arith.constant 0 : index
    %c0_168 = arith.constant 0 : index
    %135 = vector.load %arg7[%c2_165, %c2_166, %c0_167, %c0_168] : memref<3x3x128x128xf32, #tpu.memory_space<vmem>>, vector<1x1x128x128xf32>
    %136 = vector.shape_cast %135 : vector<1x1x128x128xf32> to vector<128x128xf32>
    %cst_169 = arith.constant dense<0.000000e+00> : vector<64x128xf32>
    %137 = tpu.matmul %134, %136, %cst_169 {dimension_numbers = #tpu.dot_dimension_numbers<[1], [0], [0], [1], [0, 0, 1, 1], [], []>} : vector<64x128xf32>, vector<128x128xf32>, vector<64x128xf32> -> vector<64x128xf32>
    %138 = arith.addf %132, %137 : vector<64x128xf32>
    %c0_170 = arith.constant 0 : index
    %c0_171 = arith.constant 0 : index
    %139 = vector.load %arg8[%c0_170, %c0_171] : memref<1x128xf32, #tpu.memory_space<vmem>>, vector<1x128xf32>
    %140 = vector.shape_cast %139 : vector<1x128xf32> to vector<128xf32>
    %141 = vector.shape_cast %140 : vector<128xf32> to vector<1x128xf32>
    %142 = vector.broadcast %141 : vector<1x128xf32> to vector<64x128xf32>
    %143 = arith.mulf %138, %142 : vector<64x128xf32>
    %c0_172 = arith.constant 0 : index
    %c0_173 = arith.constant 0 : index
    %144 = vector.load %arg9[%c0_172, %c0_173] : memref<1x128xf32, #tpu.memory_space<vmem>>, vector<1x128xf32>
    %145 = vector.shape_cast %144 : vector<1x128xf32> to vector<128xf32>
    %146 = vector.shape_cast %145 : vector<128xf32> to vector<1x128xf32>
    %147 = vector.broadcast %146 : vector<1x128xf32> to vector<64x128xf32>
    %148 = arith.addf %143, %147 : vector<64x128xf32>
    %cst_174 = arith.constant 0.000000e+00 : f32
    %149 = vector.broadcast %cst_174 : f32 to vector<64x128xf32>
    %150 = arith.maximumf %148, %149 : vector<64x128xf32>
    %c0_175 = arith.constant 0 : index
    %c0_176 = arith.constant 0 : index
    %c0_177 = arith.constant 0 : index
    %151 = vector.load %arg10[%c0_175, %c0_176, %c0_177] : memref<1x64x128xf32, #tpu.memory_space<vmem>>, vector<1x64x128xf32>
    %152 = vector.shape_cast %151 : vector<1x64x128xf32> to vector<64x128xf32>
    %153 = vector.shape_cast %150 : vector<64x128xf32> to vector<1x64x128xf32>
    tpu.vector_store %arg10[%c0_175, %c0_176, %c0_177], %153 {strides = array<i32>} : memref<1x64x128xf32, #tpu.memory_space<vmem>>, vector<1x64x128xf32>,
    return
  }
  func.func @transform_0(%arg0: i32) -> (i32, i32, i32) {
    %c0_i32 = arith.constant 0 : i32
    %c0_i32_0 = arith.constant 0 : i32
    %c0_i32_1 = arith.constant 0 : i32
    return %arg0, %c0_i32, %c0_i32_0 : i32, i32, i32
  }
  func.func @transform_1(%arg0: i32) -> (i32, i32) {
    %c0_i32 = arith.constant 0 : i32
    %c0_i32_0 = arith.constant 0 : i32
    %c0_i32_1 = arith.constant 0 : i32
    return %c0_i32, %c0_i32_0 : i32, i32
  }
  func.func @transform_2(%arg0: i32) -> (i32, i32) {
    %c0_i32 = arith.constant 0 : i32
    %c0_i32_0 = arith.constant 0 : i32
    %c0_i32_1 = arith.constant 0 : i32
    return %c0_i32, %c0_i32_0 : i32, i32
  }
  func.func @transform_3(%arg0: i32) -> (i32, i32, i32, i32) {
    %c0_i32 = arith.constant 0 : i32
    %c0_i32_0 = arith.constant 0 : i32
    %c0_i32_1 = arith.constant 0 : i32
    %c0_i32_2 = arith.constant 0 : i32
    %c0_i32_3 = arith.constant 0 : i32
    return %c0_i32, %c0_i32_0, %c0_i32_1, %c0_i32_2 : i32, i32, i32, i32
  }
  func.func @transform_4(%arg0: i32) -> (i32, i32) {
    %c0_i32 = arith.constant 0 : i32
    %c0_i32_0 = arith.constant 0 : i32
    %c0_i32_1 = arith.constant 0 : i32
    return %c0_i32, %c0_i32_0 : i32, i32
  }
  func.func @transform_5(%arg0: i32) -> (i32, i32) {
    %c0_i32 = arith.constant 0 : i32
    %c0_i32_0 = arith.constant 0 : i32
    %c0_i32_1 = arith.constant 0 : i32
    return %c0_i32, %c0_i32_0 : i32, i32
  }
  func.func @transform_6(%arg0: i32) -> (i32, i32, i32, i32) {
    %c0_i32 = arith.constant 0 : i32
    %c0_i32_0 = arith.constant 0 : i32
    %c0_i32_1 = arith.constant 0 : i32
    %c0_i32_2 = arith.constant 0 : i32
    %c0_i32_3 = arith.constant 0 : i32
    return %c0_i32, %c0_i32_0, %c0_i32_1, %c0_i32_2 : i32, i32, i32, i32
  }
  func.func @transform_7(%arg0: i32) -> (i32, i32) {
    %c0_i32 = arith.constant 0 : i32
    %c0_i32_0 = arith.constant 0 : i32
    %c0_i32_1 = arith.constant 0 : i32
    return %c0_i32, %c0_i32_0 : i32, i32
  }
  func.func @transform_8(%arg0: i32) -> (i32, i32) {
    %c0_i32 = arith.constant 0 : i32
    %c0_i32_0 = arith.constant 0 : i32
    %c0_i32_1 = arith.constant 0 : i32
    return %c0_i32, %c0_i32_0 : i32, i32
  }
  func.func @transform_9(%arg0: i32) -> (i32, i32, i32) {
    %c0_i32 = arith.constant 0 : i32
    %c0_i32_0 = arith.constant 0 : i32
    %c0_i32_1 = arith.constant 0 : i32
    return %arg0, %c0_i32, %c0_i32_0 : i32, i32, i32
  }
}

</mosaic_0001>

<llo_original>
// kernel: tpu_custom_call.1
$region0: #{tpu_custom_call.1}
  #allocation0 [shape = 'u32[]', space=smem, size = 0x4, offset = 0x4, fixed_abs, tag = 'smem constant byte address 0x4 - core index']
  #allocation1 [shape = 'u32[72,128]{1,0:T(1,128)}', space=vmem, size = 0x9000, scoped, tag = 'internal scratch']
  #allocation2 [shape = 'f32[6,25,128]{2,1,0:T(8,128)}', space=vmem, size = 0x18000, scoped, tag = 'scratch operand']
  %s0 = inlined_call_operand.vmem [shape: f32[2,64,16], index: 0, kind: input, shape index: {}]
  %s1 = inlined_call_operand.vmem [shape: f32[16,128], index: 1, kind: input, shape index: {}]
  %s2 = inlined_call_operand.vmem [shape: f32[1,128], index: 2, kind: input, shape index: {}]
  %s3 = inlined_call_operand.hbm [shape: f32[3,3,128,128], index: 3, kind: input, shape index: {}]
  %s4 = inlined_call_operand.vmem [shape: f32[1,128], index: 4, kind: input, shape index: {}]
  %s5 = inlined_call_operand.vmem [shape: f32[1,128], index: 5, kind: input, shape index: {}]
  %s6 = inlined_call_operand.hbm [shape: f32[3,3,128,128], index: 6, kind: input, shape index: {}]
  %s7 = inlined_call_operand.vmem [shape: f32[1,128], index: 7, kind: input, shape index: {}]
  %s8 = inlined_call_operand.vmem [shape: f32[1,128], index: 8, kind: input, shape index: {}]
  %s9 = inlined_call_operand.hbm [shape: f32[2,64,128], index: 9, kind: output, shape index: {}]
  %s10 = sld [smem:[#allocation0]]
  $region77: #{tpu_custom_call.1} parent=0
    _
  %s12 = ssub.s32 1, %s10
  %s13 = scalar_select 0, %s12, %s10
  $region1: #{tpu_custom_call.1} parent=0
    #allocation3 [shape = 'u8[589824]{0}', space=vmem, size = 0x90000, scoped, tag = 'input window, operand 3, single buffered']
    #allocation4 [shape = 's32[2]{0}', space=sflag, size = 0x8, scoped, tag = 'scoped memory for tpu_custom_call.1']
    #allocation5 [shape = 's32[2]{0}', space=sflag, size = 0x8, scoped, tag = 'scoped memory for tpu_custom_call.1']
    #allocation6 [shape = 'u8[589824]{0}', space=vmem, size = 0x90000, scoped, tag = 'input window, operand 6, single buffered']
    #allocation7 [shape = 's32[1]{0}', space=sflag, size = 0x4, scoped, tag = 'scoped memory for tpu_custom_call.1']
    #allocation8 [shape = 'u8[65536]{0}', space=vmem, size = 0x10000, scoped, tag = 'output window, operand 0']
    %14 = vsyncpa [#allocation4], 0
    %15 = vsyncpa [#allocation7], 0
    %16 = vsyncpa [#allocation5], 0
    %s17 = scalar_lea.sflag [#allocation5], 1
    %18 = vsyncpa %s17, 0
    loop: start=0, step=1, limit=4
    $region2: #{tpu_custom_call.1} parent=1 // loop_pre_header
      _
    $region3: #{tpu_custom_call.1} parent=1 // loop_header
      %s20 = sphi 0, %s24
      %p21 = scmp.ge.s32.totalorder %s20, 4
      %s30 = sphi 0, %s32
      %s33 = sphi 0, %s30
      %s34 = sphi 0, %s33
      %s50 = sphi 0, %s34
      %s54 = sphi 0, %s54
      %s56 = sphi 0, %s54
      %s57 = sphi 0, %s56
      %s71 = sphi 0, %s57
      %s75 = sphi 0, %s75
      %s77 = sphi 0, %s75
      %s78 = sphi 0, %s77
      %s92 = sphi 0, %s78
      %s96 = sphi 0, %s96
      %s98 = sphi 0, %s96
      %s99 = sphi 0, %s98
      %s113 = sphi 0, %s99
      %s117 = sphi 0, %s117
      %s119 = sphi 0, %s117
      %s120 = sphi 0, %s119
      %s134 = sphi 0, %s120
      %s138 = sphi 0, %s138
      %s140 = sphi 0, %s138
      %s141 = sphi 0, %s140
      %s155 = sphi 0, %s141
      %s159 = sphi 0, %s159
      %s161 = sphi 0, %s159
      %s162 = sphi 0, %s161
      %s176 = sphi 0, %s162
      %s180 = sphi 0, %s180
      %s182 = sphi 0, %s180
      %s183 = sphi 0, %s182
      %s197 = sphi 0, %s183
      %s201 = sphi 0, %s201
      %s203 = sphi 0, %s201
      %s204 = sphi 0, %s203
      %s218 = sphi 0, %s204
      %s224 = sphi 0, %s226
      %s227 = sphi 0, %s224
      %s228 = sphi 0, %s227
      %s244 = sphi 0, %s228
    $region4: #{tpu_custom_call.1} parent=1 // loop_header_branch
      %23 = sbr.rel (%p21) target = $region8
    $region5: #{tpu_custom_call.1} parent=1 // loop_body
      %s25 = ssub.s32 %s20, 1
      %s26 = ssub.s32 %s20, 2
      %s27 = sadd.s32 %s20, 1
      %s28 = ssub.s32 %s20, %s27
      %p29 = scmp.eq.s32.totalorder %s28, 0
      %s31 = sadd.s32 %s30, 1
      %s32 = scalar_select %p29, %s30, %s31
      %p35 = pneg %p29
      %p36 = scmp.eq.s32.totalorder %s20, 1
      %p37 = por %p35, %p36
      %p38 = scmp.ne.s32.totalorder %s30, %s33
      %p39 = scmp.eq.s32.totalorder %s20, 0
      %p40 = por %p38, %p39
      %p41 = scmp.ne.s32.totalorder %s30, %s33
      %p42 = scmp.eq.s32.totalorder %s25, 1
      %p43 = por %p41, %p42
      %p44 = scmp.ne.s32.totalorder %s33, %s34
      %p45 = scmp.eq.s32.totalorder %s25, 0
      %p46 = por %p44, %p45
      %p47 = scmp.ne.s32.totalorder %s33, %s34
      %p48 = scmp.eq.s32.totalorder %s26, 1
      %p49 = por %p47, %p48
      %p51 = scmp.ne.s32.totalorder %s34, %s50
      %p52 = scmp.eq.s32.totalorder %s26, 0
      %p53 = por %p51, %p52
      %s55 = sadd.s32 %s54, 1
      %p58 = scmp.eq.s32.totalorder %s20, 1
      %p59 = scmp.ne.s32.totalorder %s54, %s56
      %p60 = scmp.eq.s32.totalorder %s20, 0
      %p61 = por %p59, %p60
      %p62 = scmp.ne.s32.totalorder %s54, %s56
      %p63 = scmp.eq.s32.totalorder %s25, 1
      %p64 = por %p62, %p63
      %p65 = scmp.ne.s32.totalorder %s56, %s57
      %p66 = scmp.eq.s32.totalorder %s25, 0
      %p67 = por %p65, %p66
      %p68 = scmp.ne.s32.totalorder %s56, %s57
      %p69 = scmp.eq.s32.totalorder %s26, 1
      %p70 = por %p68, %p69
      %p72 = scmp.ne.s32.totalorder %s57, %s71
      %p73 = scmp.eq.s32.totalorder %s26, 0
      %p74 = por %p72, %p73
      %s76 = sadd.s32 %s75, 1
      %p79 = scmp.eq.s32.totalorder %s20, 1
      %p80 = scmp.ne.s32.totalorder %s75, %s77
      %p81 = scmp.eq.s32.totalorder %s20, 0
      %p82 = por %p80, %p81
      %p83 = scmp.ne.s32.totalorder %s75, %s77
      %p84 = scmp.eq.s32.totalorder %s25, 1
      %p85 = por %p83, %p84
      %p86 = scmp.ne.s32.totalorder %s77, %s78
      %p87 = scmp.eq.s32.totalorder %s25, 0
      %p88 = por %p86, %p87
      %p89 = scmp.ne.s32.totalorder %s77, %s78
      %p90 = scmp.eq.s32.totalorder %s26, 1
      %p91 = por %p89, %p90
      %p93 = scmp.ne.s32.totalorder %s78, %s92
      %p94 = scmp.eq.s32.totalorder %s26, 0
      %p95 = por %p93, %p94
      %s97 = sadd.s32 %s96, 1
      %p100 = scmp.eq.s32.totalorder %s20, 1
      %p101 = scmp.ne.s32.totalorder %s96, %s98
      %p102 = scmp.eq.s32.totalorder %s20, 0
      %p103 = por %p101, %p102
      %p104 = scmp.ne.s32.totalorder %s96, %s98
      %p105 = scmp.eq.s32.totalorder %s25, 1
      %p106 = por %p104, %p105
      %p107 = scmp.ne.s32.totalorder %s98, %s99
      %p108 = scmp.eq.s32.totalorder %s25, 0
      %p109 = por %p107, %p108
      %p110 = scmp.ne.s32.totalorder %s98, %s99
      %p111 = scmp.eq.s32.totalorder %s26, 1
      %p112 = por %p110, %p111
      %p114 = scmp.ne.s32.totalorder %s99, %s113
      %p115 = scmp.eq.s32.totalorder %s26, 0
      %p116 = por %p114, %p115
      %s118 = sadd.s32 %s117, 1
      %p121 = scmp.eq.s32.totalorder %s20, 1
      %p122 = scmp.ne.s32.totalorder %s117, %s119
      %p123 = scmp.eq.s32.totalorder %s20, 0
      %p124 = por %p122, %p123
      %p125 = scmp.ne.s32.totalorder %s117, %s119
      %p126 = scmp.eq.s32.totalorder %s25, 1
      %p127 = por %p125, %p126
      %p128 = scmp.ne.s32.totalorder %s119, %s120
      %p129 = scmp.eq.s32.totalorder %s25, 0
      %p130 = por %p128, %p129
      %p131 = scmp.ne.s32.totalorder %s119, %s120
      %p132 = scmp.eq.s32.totalorder %s26, 1
      %p133 = por %p131, %p132
      %p135 = scmp.ne.s32.totalorder %s120, %s134
      %p136 = scmp.eq.s32.totalorder %s26, 0
      %p137 = por %p135, %p136
      %s139 = sadd.s32 %s138, 1
      %p142 = scmp.eq.s32.totalorder %s20, 1
      %p143 = scmp.ne.s32.totalorder %s138, %s140
      %p144 = scmp.eq.s32.totalorder %s20, 0
      %p145 = por %p143, %p144
      %p146 = scmp.ne.s32.totalorder %s138, %s140
      %p147 = scmp.eq.s32.totalorder %s25, 1
      %p148 = por %p146, %p147
      %p149 = scmp.ne.s32.totalorder %s140, %s141
      %p150 = scmp.eq.s32.totalorder %s25, 0
      %p151 = por %p149, %p150
      %p152 = scmp.ne.s32.totalorder %s140, %s141
      %p153 = scmp.eq.s32.totalorder %s26, 1
      %p154 = por %p152, %p153
      %p156 = scmp.ne.s32.totalorder %s141, %s155
      %p157 = scmp.eq.s32.totalorder %s26, 0
      %p158 = por %p156, %p157
      %s160 = sadd.s32 %s159, 1
      %p163 = scmp.eq.s32.totalorder %s20, 1
      %p164 = scmp.ne.s32.totalorder %s159, %s161
      %p165 = scmp.eq.s32.totalorder %s20, 0
      %p166 = por %p164, %p165
      %p167 = scmp.ne.s32.totalorder %s159, %s161
      %p168 = scmp.eq.s32.totalorder %s25, 1
      %p169 = por %p167, %p168
      %p170 = scmp.ne.s32.totalorder %s161, %s162
      %p171 = scmp.eq.s32.totalorder %s25, 0
      %p172 = por %p170, %p171
      %p173 = scmp.ne.s32.totalorder %s161, %s162
      %p174 = scmp.eq.s32.totalorder %s26, 1
      %p175 = por %p173, %p174
      %p177 = scmp.ne.s32.totalorder %s162, %s176
      %p178 = scmp.eq.s32.totalorder %s26, 0
      %p179 = por %p177, %p178
      %s181 = sadd.s32 %s180, 1
      %p184 = scmp.eq.s32.totalorder %s20, 1
      %p185 = scmp.ne.s32.totalorder %s180, %s182
      %p186 = scmp.eq.s32.totalorder %s20, 0
      %p187 = por %p185, %p186
      %p188 = scmp.ne.s32.totalorder %s180, %s182
      %p189 = scmp.eq.s32.totalorder %s25, 1
      %p190 = por %p188, %p189
      %p191 = scmp.ne.s32.totalorder %s182, %s183
      %p192 = scmp.eq.s32.totalorder %s25, 0
      %p193 = por %p191, %p192
      %p194 = scmp.ne.s32.totalorder %s182, %s183
      %p195 = scmp.eq.s32.totalorder %s26, 1
      %p196 = por %p194, %p195
      %p198 = scmp.ne.s32.totalorder %s183, %s197
      %p199 = scmp.eq.s32.totalorder %s26, 0
      %p200 = por %p198, %p199
      %s202 = sadd.s32 %s201, 1
      %p205 = scmp.eq.s32.totalorder %s20, 1
      %p206 = scmp.ne.s32.totalorder %s201, %s203
      %p207 = scmp.eq.s32.totalorder %s20, 0
      %p208 = por %p206, %p207
      %p209 = scmp.ne.s32.totalorder %s201, %s203
      %p210 = scmp.eq.s32.totalorder %s25, 1
      %p211 = por %p209, %p210
      %p212 = scmp.ne.s32.totalorder %s203, %s204
      %p213 = scmp.eq.s32.totalorder %s25, 0
      %p214 = por %p212, %p213
      %p215 = scmp.ne.s32.totalorder %s203, %s204
      %p216 = scmp.eq.s32.totalorder %s26, 1
      %p217 = por %p215, %p216
      %p219 = scmp.ne.s32.totalorder %s204, %s218
      %p220 = scmp.eq.s32.totalorder %s26, 0
      %p221 = por %p219, %p220
      %s222 = ssub.s32 %s20, %s27
      %p223 = scmp.eq.s32.totalorder %s222, 0
      %s225 = sadd.s32 %s224, 1
      %s226 = scalar_select %p223, %s224, %s225
      %p229 = pneg %p223
      %p230 = scmp.eq.s32.totalorder %s20, 1
      %p231 = por %p229, %p230
      %p232 = scmp.ne.s32.totalorder %s224, %s227
      %p233 = scmp.eq.s32.totalorder %s20, 0
      %p234 = por %p232, %p233
      %p235 = scmp.ne.s32.totalorder %s224, %s227
      %p236 = scmp.eq.s32.totalorder %s25, 1
      %p237 = por %p235, %p236
      %p238 = scmp.ne.s32.totalorder %s227, %s228
      %p239 = scmp.eq.s32.totalorder %s25, 0
      %p240 = por %p238, %p239
      %p241 = scmp.ne.s32.totalorder %s227, %s228
      %p242 = scmp.eq.s32.totalorder %s26, 1
      %p243 = por %p241, %p242
      %p245 = scmp.ne.s32.totalorder %s228, %s244
      %p246 = scmp.eq.s32.totalorder %s26, 0
      %p247 = por %p245, %p246
      %p248 = scmp.le.s32.totalorder 1, %s20
      %p249 = scmp.lt.s32.totalorder %s20, 3
      %p250 = pnand %p248, %p249
      %p251 = pneg %p250
      // Predicated region
      $region9: #{tpu_custom_call.1} parent=5 // pred_check
        _
      $region10: #{tpu_custom_call.1} parent=5 // pred_check_branch
        %253 = sbr.rel (%p250) target = $region12
      $region11: #{tpu_custom_call.1} parent=5 // pred_region
        %s254 = ssub.s32 %s20, 1
        // Predicated region
        $region13: #{tpu_custom_call.1} parent=11 // pred_check
          %p255 = pneg %p67
        $region14: #{tpu_custom_call.1} parent=11 // pred_check_branch
          %257 = sbr.rel (%p255) target = $region16
        $region15: #{tpu_custom_call.1} parent=11 // pred_region
          _
        $region16: #{tpu_custom_call.1} parent=11 // pred_fallthru
          _
        // Predicated region
        $region17: #{tpu_custom_call.1} parent=11 // pred_check
          %p258 = pneg %p88
        $region18: #{tpu_custom_call.1} parent=11 // pred_check_branch
          %260 = sbr.rel (%p258) target = $region20
        $region19: #{tpu_custom_call.1} parent=11 // pred_region
          _
        $region20: #{tpu_custom_call.1} parent=11 // pred_fallthru
          _
        // Predicated region
        $region21: #{tpu_custom_call.1} parent=11 // pred_check
          %p261 = pneg %p109
        $region22: #{tpu_custom_call.1} parent=11 // pred_check_branch
          %263 = sbr.rel (%p261) target = $region24
        $region23: #{tpu_custom_call.1} parent=11 // pred_region
          %265 = vsyncadd [#allocation4], 0
          %s266 = sshll.u32 %s3, 4
          %s267 = int_to_ptr.hbm [resolvable:$true] %s266
          %s268 = sshll.u32 [#allocation3], 4
          %s269 = int_to_ptr.vmem [resolvable:$true] %s268
          %274 = dma.hbm_to_vmem [thread:$0]  %s267, 18432, %s269, [#allocation4], 128, 128, 8
        $region24: #{tpu_custom_call.1} parent=11 // pred_fallthru
          _
        // Predicated region
        $region25: #{tpu_custom_call.1} parent=11 // pred_check
          %p275 = pneg %p130
        $region26: #{tpu_custom_call.1} parent=11 // pred_check_branch
          %277 = sbr.rel (%p275) target = $region28
        $region27: #{tpu_custom_call.1} parent=11 // pred_region
          _
        $region28: #{tpu_custom_call.1} parent=11 // pred_fallthru
          _
        // Predicated region
        $region29: #{tpu_custom_call.1} parent=11 // pred_check
          %p278 = pneg %p151
        $region30: #{tpu_custom_call.1} parent=11 // pred_check_branch
          %280 = sbr.rel (%p278) target = $region32
        $region31: #{tpu_custom_call.1} parent=11 // pred_region
          _
        $region32: #{tpu_custom_call.1} parent=11 // pred_fallthru
          _
        // Predicated region
        $region33: #{tpu_custom_call.1} parent=11 // pred_check
          %p281 = pneg %p172
        $region34: #{tpu_custom_call.1} parent=11 // pred_check_branch
          %283 = sbr.rel (%p281) target = $region36
        $region35: #{tpu_custom_call.1} parent=11 // pred_region
          %285 = vsyncadd [#allocation7], 0
          %s286 = sshll.u32 %s6, 4
          %s287 = int_to_ptr.hbm [resolvable:$true] %s286
          %s288 = sshll.u32 [#allocation6], 4
          %s289 = int_to_ptr.vmem [resolvable:$true] %s288
          %294 = dma.hbm_to_vmem [thread:$0]  %s287, 18432, %s289, [#allocation7], 128, 128, 8
        $region36: #{tpu_custom_call.1} parent=11 // pred_fallthru
          _
        // Predicated region
        $region37: #{tpu_custom_call.1} parent=11 // pred_check
          %p295 = pneg %p193
        $region38: #{tpu_custom_call.1} parent=11 // pred_check_branch
          %297 = sbr.rel (%p295) target = $region40
        $region39: #{tpu_custom_call.1} parent=11 // pred_region
          _
        $region40: #{tpu_custom_call.1} parent=11 // pred_fallthru
          _
        // Predicated region
        $region41: #{tpu_custom_call.1} parent=11 // pred_check
          %p298 = pneg %p214
        $region42: #{tpu_custom_call.1} parent=11 // pred_check_branch
          %300 = sbr.rel (%p298) target = $region44
        $region43: #{tpu_custom_call.1} parent=11 // pred_region
          _
        $region44: #{tpu_custom_call.1} parent=11 // pred_fallthru
          _
      $region12: #{tpu_custom_call.1} parent=5 // pred_fallthru
        _
      %p301 = scmp.lt.s32.totalorder %s20, 2
      // Predicated region
      $region45: #{tpu_custom_call.1} parent=5 // pred_check
        %p302 = pneg %p301
      $region46: #{tpu_custom_call.1} parent=5 // pred_check_branch
        %304 = sbr.rel (%p302) target = $region48
      $region47: #{tpu_custom_call.1} parent=5 // pred_region
        // Predicated region
        $region49: #{tpu_custom_call.1} parent=47 // pred_check
          %p305 = pneg %p40
        $region50: #{tpu_custom_call.1} parent=47 // pred_check_branch
          %307 = sbr.rel (%p305) target = $region52
        $region51: #{tpu_custom_call.1} parent=47 // pred_region
          %p308 = scmp.lt.s32.totalorder %s20, 1
          %s309 = scalar_select %p308, %s20, 1
          %s310 = smul.addr %s309, 8
          %s311 = smul.addr %s310, 8
          %s312 = scalar_lea.vmem %s0, %s311
        $region52: #{tpu_custom_call.1} parent=47 // pred_fallthru
          _
      $region48: #{tpu_custom_call.1} parent=5 // pred_fallthru
        _
      %p313 = scmp.le.s32.totalorder 1, %s20
      %p314 = scmp.lt.s32.totalorder %s20, 3
      %p315 = pnand %p313, %p314
      %p316 = pneg %p315
      // Predicated region
      $region53: #{tpu_custom_call.1} parent=5 // pred_check
        _
      $region54: #{tpu_custom_call.1} parent=5 // pred_check_branch
        %318 = sbr.rel (%p315) target = $region56
      $region55: #{tpu_custom_call.1} parent=5 // pred_region
        %s319 = ssub.s32 %s20, 1
        // Predicated region
        $region57: #{tpu_custom_call.1} parent=55 // pred_check
          %p320 = pneg %p109
        $region58: #{tpu_custom_call.1} parent=55 // pred_check_branch
          %322 = sbr.rel (%p320) target = $region60
        $region59: #{tpu_custom_call.1} parent=55 // pred_region
          %324 = dma.done [#allocation4], 18432
        $region60: #{tpu_custom_call.1} parent=55 // pred_fallthru
          _
        // Predicated region
        $region61: #{tpu_custom_call.1} parent=55 // pred_check
          %p325 = pneg %p172
        $region62: #{tpu_custom_call.1} parent=55 // pred_check_branch
          %327 = sbr.rel (%p325) target = $region64
        $region63: #{tpu_custom_call.1} parent=55 // pred_region
          %329 = dma.done [#allocation7], 18432
        $region64: #{tpu_custom_call.1} parent=55 // pred_fallthru
          _
        %p330 = scmp.lt.s32.totalorder %s25, 1
        %s331 = scalar_select %p330, %s25, 1
        %s332 = smul.addr %s331, 8
        %s333 = smul.addr %s332, 8
        %s334 = scalar_lea.vmem %s0, %s333
        %p335 = pneg %p46
        %p336 = pneg %p43
        %p337 = pneg %p67
        %p338 = pneg %p64
        %p339 = pneg %p88
        %p340 = pneg %p85
        %p341 = pneg %p109
        %p342 = pneg %p106
        %p343 = pneg %p130
        %p344 = pneg %p127
        %p345 = pneg %p151
        %p346 = pneg %p148
        %p347 = pneg %p172
        %p348 = pneg %p169
        %p349 = pneg %p193
        %p350 = pneg %p190
        %p351 = pneg %p214
        %p352 = pneg %p211
        %p353 = pneg %p240
        %p354 = pneg %p237
        %s355 = sand.u32 %s227, 1
        %s356 = scalar_lea.sflag [#allocation5], %s355
        %s357 = sand.u32 %s227, 1
        %s358 = smul.addr %s357, 64
        %s359 = scalar_lea.vmem [#allocation8], %s358
        %p360 = scmp.lt.s32.totalorder %s25, 1
        %s361 = scalar_select %p360, %s25, 1
        %s362 = smul.addr %s361, 8
        %s363 = smul.addr %s362, 8
        %s364 = scalar_lea.vmem %s0, %s363
        %365 = vst [vmem:[#allocation2] sm:$0xff] 0.0
        %366 = vst [vmem:[#allocation2 + $0x8] sm:$0xff] 0.0
        %367 = vst [vmem:[#allocation2 + $0x10] sm:$0xff] 0.0
        %368 = vst [vmem:[#allocation2 + $0x18] sm:$0x1] 0.0
        %s369 = scalar_lea.vmem [#allocation2], 160
        %370 = vst [vmem:[%s369] sm:$0xff] 0.0
        %371 = vst [vmem:[%s369 + $0x8] sm:$0xff] 0.0
        %372 = vst [vmem:[%s369 + $0x10] sm:$0xff] 0.0
        %373 = vst [vmem:[%s369 + $0x18] sm:$0x1] 0.0
        %s374 = scalar_lea.vmem [#allocation2], 32
        %375 = vst [vmem:[%s374 + $0x7] sm:$0x1] 0.0
        %376 = vst [vmem:[%s374 + $0x27] sm:$0x1] 0.0
        %377 = vst [vmem:[%s374 + $0x47] sm:$0x1] 0.0
        %378 = vst [vmem:[%s374 + $0x67] sm:$0x1] 0.0
        %379 = vst [vmem:[%s374 + $0x18] sm:$0x1] 0.0
        %380 = vst [vmem:[%s374 + $0x38] sm:$0x1] 0.0
        %381 = vst [vmem:[%s374 + $0x58] sm:$0x1] 0.0
        %382 = vst [vmem:[%s374 + $0x78] sm:$0x1] 0.0
        %v383 = vld [vmem:[%s364] sm:$0xff]
        %v384 = vld [vmem:[%s364 + $0x8] sm:$0xff]
        %v385 = vld [vmem:[%s364 + $0x10] sm:$0xff]
        %v386 = vld [vmem:[%s364 + $0x18] sm:$0xff]
        %v387 = vld [vmem:[%s364 + $0x20] sm:$0xff]
        %v388 = vld [vmem:[%s364 + $0x28] sm:$0xff]
        %v389 = vld [vmem:[%s364 + $0x30] sm:$0xff]
        %v390 = vld [vmem:[%s364 + $0x38] sm:$0xff]
        %v391 = vld [vmem:[%s1] sm:$0xff]
        %v392 = vld [vmem:[%s1 + $0x8] sm:$0xff]
        %v393 = vld [vmem:[%s2] sm:$0x1]
        %v395 = vperm.slane %v393, 0
        %vm397 = vcmask 130048
        %v399 = vsel %vm397, %v383, 0
        %v402 = vsel %vm397, %v384, 0
        %v405 = vsel %vm397, %v385, 0
        %v408 = vsel %vm397, %v386, 0
        %v411 = vsel %vm397, %v387, 0
        %v414 = vsel %vm397, %v388, 0
        %v417 = vsel %vm397, %v389, 0
        %v420 = vsel %vm397, %v390, 0
        %422 = vmatpush.msra.mxu0 0.0
        %423 = vmatpush.msra.mxu0 0.0
        %424 = vmatpush.msra.mxu0 0.0
        %425 = vmatpush.msra.mxu0 0.0
        %426 = vmatpush.msra.mxu0 0.0
        %427 = vmatpush.msra.mxu0 0.0
        %428 = vmatpush.msra.mxu0 0.0
        %429 = vmatpush.msra.mxu0 0.0
        %430 = vmatpush.msra.mxu0 0.0
        %431 = vmatpush.msra.mxu0 0.0
        %432 = vmatpush.msra.mxu0 0.0
        %433 = vmatpush.msra.mxu0 0.0
        %434 = vmatpush.msra.mxu0 0.0
        %435 = vmatpush.msra.mxu0 0.0
        %436 = vmatpush.msra.mxu0 %v392
        %437 = vmatpush.msra.mxu0 %v391
        %438 = vmatmul.f32.gmra.mxu0 %v399
        %v439 = vpop.f32.mrf.mxu0
        %v440 = vadd.f32 %v395, %v439
        %441 = vmatmul.f32.gmra.mxu0 %v402
        %v442 = vpop.f32.mrf.mxu0
        %v443 = vadd.f32 %v395, %v442
        %444 = vmatmul.f32.gmra.mxu0 %v405
        %v445 = vpop.f32.mrf.mxu0
        %v446 = vadd.f32 %v395, %v445
        %447 = vmatmul.f32.gmra.mxu0 %v408
        %v448 = vpop.f32.mrf.mxu0
        %v449 = vadd.f32 %v395, %v448
        %450 = vmatmul.f32.gmra.mxu0 %v411
        %v451 = vpop.f32.mrf.mxu0
        %v452 = vadd.f32 %v395, %v451
        %453 = vmatmul.f32.gmra.mxu0 %v414
        %v454 = vpop.f32.mrf.mxu0
        %v455 = vadd.f32 %v395, %v454
        %456 = vmatmul.f32.gmra.mxu0 %v417
        %v457 = vpop.f32.mrf.mxu0
        %v458 = vadd.f32 %v395, %v457
        %459 = vmatmul.f32.gmra.mxu0 %v420
        %v460 = vpop.f32.mrf.mxu0
        %v461 = vadd.f32 %v395, %v460
        %462 = vdwg.mxu0
        %463 = vst [vmem:[%s374 + $0x8] sm:$0xff] %v440
        %464 = vst [vmem:[%s374 + $0x10] sm:$0xff] %v443
        %465 = vst [vmem:[%s374 + $0x28] sm:$0xff] %v446
        %466 = vst [vmem:[%s374 + $0x30] sm:$0xff] %v449
        %467 = vst [vmem:[%s374 + $0x48] sm:$0xff] %v452
        %468 = vst [vmem:[%s374 + $0x50] sm:$0xff] %v455
        %469 = vst [vmem:[%s374 + $0x68] sm:$0xff] %v458
        %470 = vst [vmem:[%s374 + $0x70] sm:$0xff] %v461
        %v471 = vld [vmem:[#allocation2 + $0x7] sm:$0xff]
        %v472 = vld [vmem:[#allocation2 + $0xf] sm:$0xff]
        %v473 = vld [vmem:[#allocation2 + $0x27] sm:$0xff]
        %v474 = vld [vmem:[#allocation2 + $0x2f] sm:$0xff]
        %v475 = vld [vmem:[#allocation2 + $0x47] sm:$0xff]
        %v476 = vld [vmem:[#allocation2 + $0x4f] sm:$0xff]
        %v477 = vld [vmem:[#allocation2 + $0x67] sm:$0xff]
        %v478 = vld [vmem:[#allocation2 + $0x6f] sm:$0xff]
        %v479 = vld [vmem:[#allocation3] sm:$0xff]
        %v480 = vld [vmem:[#allocation3 + $0x8] sm:$0xff]
        %v481 = vld [vmem:[#allocation3 + $0x10] sm:$0xff]
        %v482 = vld [vmem:[#allocation3 + $0x18] sm:$0xff]
        %v483 = vld [vmem:[#allocation3 + $0x20] sm:$0xff]
        %v484 = vld [vmem:[#allocation3 + $0x28] sm:$0xff]
        %v485 = vld [vmem:[#allocation3 + $0x30] sm:$0xff]
        %v486 = vld [vmem:[#allocation3 + $0x38] sm:$0xff]
        %v487 = vld [vmem:[#allocation3 + $0x40] sm:$0xff]
        %v488 = vld [vmem:[#allocation3 + $0x48] sm:$0xff]
        %v489 = vld [vmem:[#allocation3 + $0x50] sm:$0xff]
        %v490 = vld [vmem:[#allocation3 + $0x58] sm:$0xff]
        %v491 = vld [vmem:[#allocation3 + $0x60] sm:$0xff]
        %v492 = vld [vmem:[#allocation3 + $0x68] sm:$0xff]
        %v493 = vld [vmem:[#allocation3 + $0x70] sm:$0xff]
        %v494 = vld [vmem:[#allocation3 + $0x78] sm:$0xff]
        %v495 = vld [vmem:[#allocation2 + $0x8] sm:$0xff]
        %v496 = vld [vmem:[#allocation2 + $0x10] sm:$0xff]
        %v497 = vld [vmem:[#allocation2 + $0x28] sm:$0xff]
        %v498 = vld [vmem:[#allocation2 + $0x30] sm:$0xff]
        %v499 = vld [vmem:[#allocation2 + $0x48] sm:$0xff]
        %v500 = vld [vmem:[#allocation2 + $0x50] sm:$0xff]
        %v501 = vld [vmem:[#allocation2 + $0x68] sm:$0xff]
        %v502 = vld [vmem:[#allocation2 + $0x70] sm:$0xff]
        %s503 = scalar_lea.vmem [#allocation3], 384
        %v504 = vld [vmem:[%s503] sm:$0xff]
        %v505 = vld [vmem:[%s503 + $0x8] sm:$0xff]
        %v506 = vld [vmem:[%s503 + $0x10] sm:$0xff]
        %v507 = vld [vmem:[%s503 + $0x18] sm:$0xff]
        %v508 = vld [vmem:[%s503 + $0x20] sm:$0xff]
        %v509 = vld [vmem:[%s503 + $0x28] sm:$0xff]
        %v510 = vld [vmem:[%s503 + $0x30] sm:$0xff]
        %v511 = vld [vmem:[%s503 + $0x38] sm:$0xff]
        %v512 = vld [vmem:[%s503 + $0x40] sm:$0xff]
        %v513 = vld [vmem:[%s503 + $0x48] sm:$0xff]
        %v514 = vld [vmem:[%s503 + $0x50] sm:$0xff]
        %v515 = vld [vmem:[%s503 + $0x58] sm:$0xff]
        %v516 = vld [vmem:[%s503 + $0x60] sm:$0xff]
        %v517 = vld [vmem:[%s503 + $0x68] sm:$0xff]
        %v518 = vld [vmem:[%s503 + $0x70] sm:$0xff]
        %v519 = vld [vmem:[%s503 + $0x78] sm:$0xff]
        %520 = vmatpush.msra.mxu0 %v519
        %521 = vmatpush.msra.mxu0 %v518
        %522 = vmatpush.msra.mxu0 %v517
        %523 = vmatpush.msra.mxu0 %v516
        %524 = vmatpush.msra.mxu0 %v515
        %525 = vmatpush.msra.mxu0 %v514
        %526 = vmatpush.msra.mxu0 %v513
        %527 = vmatpush.msra.mxu0 %v512
        %528 = vmatpush.msra.mxu0 %v511
        %529 = vmatpush.msra.mxu0 %v510
        %530 = vmatpush.msra.mxu0 %v509
        %531 = vmatpush.msra.mxu0 %v508
        %532 = vmatpush.msra.mxu0 %v507
        %533 = vmatpush.msra.mxu0 %v506
        %534 = vmatpush.msra.mxu0 %v505
        %535 = vmatpush.msra.mxu0 %v504
        %536 = vmatmul.f32.gmra.mxu0 %v495
        %v537 = vpop.f32.mrf.mxu0
        %v538 = vadd.f32 0.0, %v537
        %539 = vmatmul.f32.gmra.mxu0 %v496
        %v540 = vpop.f32.mrf.mxu0
        %v541 = vadd.f32 0.0, %v540
        %542 = vmatmul.f32.gmra.mxu0 %v497
        %v543 = vpop.f32.mrf.mxu0
        %v544 = vadd.f32 0.0, %v543
        %545 = vmatmul.f32.gmra.mxu0 %v498
        %v546 = vpop.f32.mrf.mxu0
        %v547 = vadd.f32 0.0, %v546
        %548 = vmatmul.f32.gmra.mxu0 %v499
        %v549 = vpop.f32.mrf.mxu0
        %v550 = vadd.f32 0.0, %v549
        %551 = vmatmul.f32.gmra.mxu0 %v500
        %v552 = vpop.f32.mrf.mxu0
        %v553 = vadd.f32 0.0, %v552
        %554 = vmatmul.f32.gmra.mxu0 %v501
        %v555 = vpop.f32.mrf.mxu0
        %v556 = vadd.f32 0.0, %v555
        %557 = vmatmul.f32.gmra.mxu0 %v502
        %v558 = vpop.f32.mrf.mxu0
        %v559 = vadd.f32 0.0, %v558
        %560 = vdwg.mxu0
        %561 = vmatpush.msra.mxu0 %v494
        %562 = vmatpush.msra.mxu0 %v493
        %563 = vmatpush.msra.mxu0 %v492
        %564 = vmatpush.msra.mxu0 %v491
        %565 = vmatpush.msra.mxu0 %v490
        %566 = vmatpush.msra.mxu0 %v489
        %567 = vmatpush.msra.mxu0 %v488
        %568 = vmatpush.msra.mxu0 %v487
        %569 = vmatpush.msra.mxu0 %v486
        %570 = vmatpush.msra.mxu0 %v485
        %571 = vmatpush.msra.mxu0 %v484
        %572 = vmatpush.msra.mxu0 %v483
        %573 = vmatpush.msra.mxu0 %v482
        %574 = vmatpush.msra.mxu0 %v481
        %575 = vmatpush.msra.mxu0 %v480
        %576 = vmatpush.msra.mxu0 %v479
        %577 = vmatmul.f32.gmra.mxu0 %v471
        %v578 = vpop.f32.mrf.mxu0
        %v579 = vadd.f32 %v538, %v578
        %580 = vmatmul.f32.gmra.mxu0 %v472
        %v581 = vpop.f32.mrf.mxu0
        %v582 = vadd.f32 %v541, %v581
        %583 = vmatmul.f32.gmra.mxu0 %v473
        %v584 = vpop.f32.mrf.mxu0
        %v585 = vadd.f32 %v544, %v584
        %586 = vmatmul.f32.gmra.mxu0 %v474
        %v587 = vpop.f32.mrf.mxu0
        %v588 = vadd.f32 %v547, %v587
        %589 = vmatmul.f32.gmra.mxu0 %v475
        %v590 = vpop.f32.mrf.mxu0
        %v591 = vadd.f32 %v550, %v590
        %592 = vmatmul.f32.gmra.mxu0 %v476
        %v593 = vpop.f32.mrf.mxu0
        %v594 = vadd.f32 %v553, %v593
        %595 = vmatmul.f32.gmra.mxu0 %v477
        %v596 = vpop.f32.mrf.mxu0
        %v597 = vadd.f32 %v556, %v596
        %598 = vmatmul.f32.gmra.mxu0 %v478
        %v599 = vpop.f32.mrf.mxu0
        %v600 = vadd.f32 %v559, %v599
        %601 = vdwg.mxu0
        %v602 = vld [vmem:[#allocation2 + $0x9] sm:$0xff]
        %v603 = vld [vmem:[#allocation2 + $0x11] sm:$0xff]
        %v604 = vld [vmem:[#allocation2 + $0x29] sm:$0xff]
        %v605 = vld [vmem:[#allocation2 + $0x31] sm:$0xff]
        %v606 = vld [vmem:[#allocation2 + $0x49] sm:$0xff]
        %v607 = vld [vmem:[#allocation2 + $0x51] sm:$0xff]
        %v608 = vld [vmem:[#allocation2 + $0x69] sm:$0xff]
        %v609 = vld [vmem:[#allocation2 + $0x71] sm:$0xff]
        %s610 = scalar_lea.vmem [#allocation3], 768
        %v611 = vld [vmem:[%s610] sm:$0xff]
        %v612 = vld [vmem:[%s610 + $0x8] sm:$0xff]
        %v613 = vld [vmem:[%s610 + $0x10] sm:$0xff]
        %v614 = vld [vmem:[%s610 + $0x18] sm:$0xff]
        %v615 = vld [vmem:[%s610 + $0x20] sm:$0xff]
        %v616 = vld [vmem:[%s610 + $0x28] sm:$0xff]
        %v617 = vld [vmem:[%s610 + $0x30] sm:$0xff]
        %v618 = vld [vmem:[%s610 + $0x38] sm:$0xff]
        %v619 = vld [vmem:[%s610 + $0x40] sm:$0xff]
        %v620 = vld [vmem:[%s610 + $0x48] sm:$0xff]
        %v621 = vld [vmem:[%s610 + $0x50] sm:$0xff]
        %v622 = vld [vmem:[%s610 + $0x58] sm:$0xff]
        %v623 = vld [vmem:[%s610 + $0x60] sm:$0xff]
        %v624 = vld [vmem:[%s610 + $0x68] sm:$0xff]
        %v625 = vld [vmem:[%s610 + $0x70] sm:$0xff]
        %v626 = vld [vmem:[%s610 + $0x78] sm:$0xff]
        %627 = vmatpush.msra.mxu0 %v626
        %628 = vmatpush.msra.mxu0 %v625
        %629 = vmatpush.msra.mxu0 %v624
        %630 = vmatpush.msra.mxu0 %v623
        %631 = vmatpush.msra.mxu0 %v622
        %632 = vmatpush.msra.mxu0 %v621
        %633 = vmatpush.msra.mxu0 %v620
        %634 = vmatpush.msra.mxu0 %v619
        %635 = vmatpush.msra.mxu0 %v618
        %636 = vmatpush.msra.mxu0 %v617
        %637 = vmatpush.msra.mxu0 %v616
        %638 = vmatpush.msra.mxu0 %v615
        %639 = vmatpush.msra.mxu0 %v614
        %640 = vmatpush.msra.mxu0 %v613
        %641 = vmatpush.msra.mxu0 %v612
        %642 = vmatpush.msra.mxu0 %v611
        %643 = vmatmul.f32.gmra.mxu0 %v602
        %v644 = vpop.f32.mrf.mxu0
        %v645 = vadd.f32 0.0, %v644
        %646 = vmatmul.f32.gmra.mxu0 %v603
        %v647 = vpop.f32.mrf.mxu0
        %v648 = vadd.f32 0.0, %v647
        %649 = vmatmul.f32.gmra.mxu0 %v604
        %v650 = vpop.f32.mrf.mxu0
        %v651 = vadd.f32 0.0, %v650
        %652 = vmatmul.f32.gmra.mxu0 %v605
        %v653 = vpop.f32.mrf.mxu0
        %v654 = vadd.f32 0.0, %v653
        %655 = vmatmul.f32.gmra.mxu0 %v606
        %v656 = vpop.f32.mrf.mxu0
        %v657 = vadd.f32 0.0, %v656
        %658 = vmatmul.f32.gmra.mxu0 %v607
        %v659 = vpop.f32.mrf.mxu0
        %v660 = vadd.f32 0.0, %v659
        %661 = vmatmul.f32.gmra.mxu0 %v608
        %v662 = vpop.f32.mrf.mxu0
        %v663 = vadd.f32 0.0, %v662
        %664 = vmatmul.f32.gmra.mxu0 %v609
        %v665 = vpop.f32.mrf.mxu0
        %v666 = vadd.f32 0.0, %v665
        %667 = vdwg.mxu0
        %v668 = vadd.f32 %v579, %v645
        %v669 = vadd.f32 %v582, %v648
        %v670 = vadd.f32 %v585, %v651
        %v671 = vadd.f32 %v588, %v654
        %v672 = vadd.f32 %v591, %v657
        %v673 = vadd.f32 %v594, %v660
        %v674 = vadd.f32 %v597, %v663
        %v675 = vadd.f32 %v600, %v666
        %v676 = vld [vmem:[%s374 + $0x7] sm:$0xff]
        %v677 = vld [vmem:[%s374 + $0xf] sm:$0xff]
        %v678 = vld [vmem:[%s374 + $0x27] sm:$0xff]
        %v679 = vld [vmem:[%s374 + $0x2f] sm:$0xff]
        %v680 = vld [vmem:[%s374 + $0x47] sm:$0xff]
        %v681 = vld [vmem:[%s374 + $0x4f] sm:$0xff]
        %v682 = vld [vmem:[%s374 + $0x67] sm:$0xff]
        %v683 = vld [vmem:[%s374 + $0x6f] sm:$0xff]
        %s684 = scalar_lea.vmem [#allocation3], 128
        %v685 = vld [vmem:[%s684] sm:$0xff]
        %v686 = vld [vmem:[%s684 + $0x8] sm:$0xff]
        %v687 = vld [vmem:[%s684 + $0x10] sm:$0xff]
        %v688 = vld [vmem:[%s684 + $0x18] sm:$0xff]
        %v689 = vld [vmem:[%s684 + $0x20] sm:$0xff]
        %v690 = vld [vmem:[%s684 + $0x28] sm:$0xff]
        %v691 = vld [vmem:[%s684 + $0x30] sm:$0xff]
        %v692 = vld [vmem:[%s684 + $0x38] sm:$0xff]
        %v693 = vld [vmem:[%s684 + $0x40] sm:$0xff]
        %v694 = vld [vmem:[%s684 + $0x48] sm:$0xff]
        %v695 = vld [vmem:[%s684 + $0x50] sm:$0xff]
        %v696 = vld [vmem:[%s684 + $0x58] sm:$0xff]
        %v697 = vld [vmem:[%s684 + $0x60] sm:$0xff]
        %v698 = vld [vmem:[%s684 + $0x68] sm:$0xff]
        %v699 = vld [vmem:[%s684 + $0x70] sm:$0xff]
        %v700 = vld [vmem:[%s684 + $0x78] sm:$0xff]
        %701 = vmatpush.msra.mxu0 %v700
        %702 = vmatpush.msra.mxu0 %v699
        %703 = vmatpush.msra.mxu0 %v698
        %704 = vmatpush.msra.mxu0 %v697
        %705 = vmatpush.msra.mxu0 %v696
        %706 = vmatpush.msra.mxu0 %v695
        %707 = vmatpush.msra.mxu0 %v694
        %708 = vmatpush.msra.mxu0 %v693
        %709 = vmatpush.msra.mxu0 %v692
        %710 = vmatpush.msra.mxu0 %v691
        %711 = vmatpush.msra.mxu0 %v690
        %712 = vmatpush.msra.mxu0 %v689
        %713 = vmatpush.msra.mxu0 %v688
        %714 = vmatpush.msra.mxu0 %v687
        %715 = vmatpush.msra.mxu0 %v686
        %716 = vmatpush.msra.mxu0 %v685
        %717 = vmatmul.f32.gmra.mxu0 %v676
        %v718 = vpop.f32.mrf.mxu0
        %v719 = vadd.f32 0.0, %v718
        %720 = vmatmul.f32.gmra.mxu0 %v677
        %v721 = vpop.f32.mrf.mxu0
        %v722 = vadd.f32 0.0, %v721
        %723 = vmatmul.f32.gmra.mxu0 %v678
        %v724 = vpop.f32.mrf.mxu0
        %v725 = vadd.f32 0.0, %v724
        %726 = vmatmul.f32.gmra.mxu0 %v679
        %v727 = vpop.f32.mrf.mxu0
        %v728 = vadd.f32 0.0, %v727
        %729 = vmatmul.f32.gmra.mxu0 %v680
        %v730 = vpop.f32.mrf.mxu0
        %v731 = vadd.f32 0.0, %v730
        %732 = vmatmul.f32.gmra.mxu0 %v681
        %v733 = vpop.f32.mrf.mxu0
        %v734 = vadd.f32 0.0, %v733
        %735 = vmatmul.f32.gmra.mxu0 %v682
        %v736 = vpop.f32.mrf.mxu0
        %v737 = vadd.f32 0.0, %v736
        %738 = vmatmul.f32.gmra.mxu0 %v683
        %v739 = vpop.f32.mrf.mxu0
        %v740 = vadd.f32 0.0, %v739
        %741 = vdwg.mxu0
        %v742 = vadd.f32 %v668, %v719
        %v743 = vadd.f32 %v669, %v722
        %v744 = vadd.f32 %v670, %v725
        %v745 = vadd.f32 %v671, %v728
        %v746 = vadd.f32 %v672, %v731
        %v747 = vadd.f32 %v673, %v734
        %v748 = vadd.f32 %v674, %v737
        %v749 = vadd.f32 %v675, %v740
        %v750 = vld [vmem:[%s374 + $0x8] sm:$0xff]
        %v751 = vld [vmem:[%s374 + $0x10] sm:$0xff]
        %v752 = vld [vmem:[%s374 + $0x28] sm:$0xff]
        %v753 = vld [vmem:[%s374 + $0x30] sm:$0xff]
        %v754 = vld [vmem:[%s374 + $0x48] sm:$0xff]
        %v755 = vld [vmem:[%s374 + $0x50] sm:$0xff]
        %v756 = vld [vmem:[%s374 + $0x68] sm:$0xff]
        %v757 = vld [vmem:[%s374 + $0x70] sm:$0xff]
        %s758 = scalar_lea.vmem [#allocation3], 512
        %v759 = vld [vmem:[%s758] sm:$0xff]
        %v760 = vld [vmem:[%s758 + $0x8] sm:$0xff]
        %v761 = vld [vmem:[%s758 + $0x10] sm:$0xff]
        %v762 = vld [vmem:[%s758 + $0x18] sm:$0xff]
        %v763 = vld [vmem:[%s758 + $0x20] sm:$0xff]
        %v764 = vld [vmem:[%s758 + $0x28] sm:$0xff]
        %v765 = vld [vmem:[%s758 + $0x30] sm:$0xff]
        %v766 = vld [vmem:[%s758 + $0x38] sm:$0xff]
        %v767 = vld [vmem:[%s758 + $0x40] sm:$0xff]
        %v768 = vld [vmem:[%s758 + $0x48] sm:$0xff]
        %v769 = vld [vmem:[%s758 + $0x50] sm:$0xff]
        %v770 = vld [vmem:[%s758 + $0x58] sm:$0xff]
        %v771 = vld [vmem:[%s758 + $0x60] sm:$0xff]
        %v772 = vld [vmem:[%s758 + $0x68] sm:$0xff]
        %v773 = vld [vmem:[%s758 + $0x70] sm:$0xff]
        %v774 = vld [vmem:[%s758 + $0x78] sm:$0xff]
        %775 = vmatpush.msra.mxu0 %v774
        %776 = vmatpush.msra.mxu0 %v773
        %777 = vmatpush.msra.mxu0 %v772
        %778 = vmatpush.msra.mxu0 %v771
        %779 = vmatpush.msra.mxu0 %v770
        %780 = vmatpush.msra.mxu0 %v769
        %781 = vmatpush.msra.mxu0 %v768
        %782 = vmatpush.msra.mxu0 %v767
        %783 = vmatpush.msra.mxu0 %v766
        %784 = vmatpush.msra.mxu0 %v765
        %785 = vmatpush.msra.mxu0 %v764
        %786 = vmatpush.msra.mxu0 %v763
        %787 = vmatpush.msra.mxu0 %v762
        %788 = vmatpush.msra.mxu0 %v761
        %789 = vmatpush.msra.mxu0 %v760
        %790 = vmatpush.msra.mxu0 %v759
        %791 = vmatmul.f32.gmra.mxu0 %v750
        %v792 = vpop.f32.mrf.mxu0
        %v793 = vadd.f32 0.0, %v792
        %794 = vmatmul.f32.gmra.mxu0 %v751
        %v795 = vpop.f32.mrf.mxu0
        %v796 = vadd.f32 0.0, %v795
        %797 = vmatmul.f32.gmra.mxu0 %v752
        %v798 = vpop.f32.mrf.mxu0
        %v799 = vadd.f32 0.0, %v798
        %800 = vmatmul.f32.gmra.mxu0 %v753
        %v801 = vpop.f32.mrf.mxu0
        %v802 = vadd.f32 0.0, %v801
        %803 = vmatmul.f32.gmra.mxu0 %v754
        %v804 = vpop.f32.mrf.mxu0
        %v805 = vadd.f32 0.0, %v804
        %806 = vmatmul.f32.gmra.mxu0 %v755
        %v807 = vpop.f32.mrf.mxu0
        %v808 = vadd.f32 0.0, %v807
        %809 = vmatmul.f32.gmra.mxu0 %v756
        %v810 = vpop.f32.mrf.mxu0
        %v811 = vadd.f32 0.0, %v810
        %812 = vmatmul.f32.gmra.mxu0 %v757
        %v813 = vpop.f32.mrf.mxu0
        %v814 = vadd.f32 0.0, %v813
        %815 = vdwg.mxu0
        %v816 = vadd.f32 %v742, %v793
        %v817 = vadd.f32 %v743, %v796
        %v818 = vadd.f32 %v744, %v799
        %v819 = vadd.f32 %v745, %v802
        %v820 = vadd.f32 %v746, %v805
        %v821 = vadd.f32 %v747, %v808
        %v822 = vadd.f32 %v748, %v811
        %v823 = vadd.f32 %v749, %v814
        %v824 = vld [vmem:[%s374 + $0x9] sm:$0xff]
        %v825 = vld [vmem:[%s374 + $0x11] sm:$0xff]
        %v826 = vld [vmem:[%s374 + $0x29] sm:$0xff]
        %v827 = vld [vmem:[%s374 + $0x31] sm:$0xff]
        %v828 = vld [vmem:[%s374 + $0x49] sm:$0xff]
        %v829 = vld [vmem:[%s374 + $0x51] sm:$0xff]
        %v830 = vld [vmem:[%s374 + $0x69] sm:$0xff]
        %v831 = vld [vmem:[%s374 + $0x71] sm:$0xff]
        %s832 = scalar_lea.vmem [#allocation3], 896
        %v833 = vld [vmem:[%s832] sm:$0xff]
        %v834 = vld [vmem:[%s832 + $0x8] sm:$0xff]
        %v835 = vld [vmem:[%s832 + $0x10] sm:$0xff]
        %v836 = vld [vmem:[%s832 + $0x18] sm:$0xff]
        %v837 = vld [vmem:[%s832 + $0x20] sm:$0xff]
        %v838 = vld [vmem:[%s832 + $0x28] sm:$0xff]
        %v839 = vld [vmem:[%s832 + $0x30] sm:$0xff]
        %v840 = vld [vmem:[%s832 + $0x38] sm:$0xff]
        %v841 = vld [vmem:[%s832 + $0x40] sm:$0xff]
        %v842 = vld [vmem:[%s832 + $0x48] sm:$0xff]
        %v843 = vld [vmem:[%s832 + $0x50] sm:$0xff]
        %v844 = vld [vmem:[%s832 + $0x58] sm:$0xff]
        %v845 = vld [vmem:[%s832 + $0x60] sm:$0xff]
        %v846 = vld [vmem:[%s832 + $0x68] sm:$0xff]
        %v847 = vld [vmem:[%s832 + $0x70] sm:$0xff]
        %v848 = vld [vmem:[%s832 + $0x78] sm:$0xff]
        %849 = vmatpush.msra.mxu0 %v848
        %850 = vmatpush.msra.mxu0 %v847
        %851 = vmatpush.msra.mxu0 %v846
        %852 = vmatpush.msra.mxu0 %v845
        %853 = vmatpush.msra.mxu0 %v844
        %854 = vmatpush.msra.mxu0 %v843
        %855 = vmatpush.msra.mxu0 %v842
        %856 = vmatpush.msra.mxu0 %v841
        %857 = vmatpush.msra.mxu0 %v840
        %858 = vmatpush.msra.mxu0 %v839
        %859 = vmatpush.msra.mxu0 %v838
        %860 = vmatpush.msra.mxu0 %v837
        %861 = vmatpush.msra.mxu0 %v836
        %862 = vmatpush.msra.mxu0 %v835
        %863 = vmatpush.msra.mxu0 %v834
        %864 = vmatpush.msra.mxu0 %v833
        %865 = vmatmul.f32.gmra.mxu0 %v824
        %v866 = vpop.f32.mrf.mxu0
        %v867 = vadd.f32 0.0, %v866
        %868 = vmatmul.f32.gmra.mxu0 %v825
        %v869 = vpop.f32.mrf.mxu0
        %v870 = vadd.f32 0.0, %v869
        %871 = vmatmul.f32.gmra.mxu0 %v826
        %v872 = vpop.f32.mrf.mxu0
        %v873 = vadd.f32 0.0, %v872
        %874 = vmatmul.f32.gmra.mxu0 %v827
        %v875 = vpop.f32.mrf.mxu0
        %v876 = vadd.f32 0.0, %v875
        %877 = vmatmul.f32.gmra.mxu0 %v828
        %v878 = vpop.f32.mrf.mxu0
        %v879 = vadd.f32 0.0, %v878
        %880 = vmatmul.f32.gmra.mxu0 %v829
        %v881 = vpop.f32.mrf.mxu0
        %v882 = vadd.f32 0.0, %v881
        %883 = vmatmul.f32.gmra.mxu0 %v830
        %v884 = vpop.f32.mrf.mxu0
        %v885 = vadd.f32 0.0, %v884
        %886 = vmatmul.f32.gmra.mxu0 %v831
        %v887 = vpop.f32.mrf.mxu0
        %v888 = vadd.f32 0.0, %v887
        %889 = vdwg.mxu0
        %v890 = vadd.f32 %v816, %v867
        %v891 = vadd.f32 %v817, %v870
        %v892 = vadd.f32 %v818, %v873
        %v893 = vadd.f32 %v819, %v876
        %v894 = vadd.f32 %v820, %v879
        %v895 = vadd.f32 %v821, %v882
        %v896 = vadd.f32 %v822, %v885
        %v897 = vadd.f32 %v823, %v888
        %s898 = scalar_lea.vmem [#allocation2], 64
        %v899 = vld [vmem:[%s898 + $0x7] sm:$0xff]
        %v900 = vld [vmem:[%s898 + $0xf] sm:$0xff]
        %v901 = vld [vmem:[%s898 + $0x27] sm:$0xff]
        %v902 = vld [vmem:[%s898 + $0x2f] sm:$0xff]
        %v903 = vld [vmem:[%s898 + $0x47] sm:$0xff]
        %v904 = vld [vmem:[%s898 + $0x4f] sm:$0xff]
        %v905 = vld [vmem:[%s898 + $0x67] sm:$0xff]
        %v906 = vld [vmem:[%s898 + $0x6f] sm:$0xff]
        %s907 = scalar_lea.vmem [#allocation3], 256
        %v908 = vld [vmem:[%s907] sm:$0xff]
        %v909 = vld [vmem:[%s907 + $0x8] sm:$0xff]
        %v910 = vld [vmem:[%s907 + $0x10] sm:$0xff]
        %v911 = vld [vmem:[%s907 + $0x18] sm:$0xff]
        %v912 = vld [vmem:[%s907 + $0x20] sm:$0xff]
        %v913 = vld [vmem:[%s907 + $0x28] sm:$0xff]
        %v914 = vld [vmem:[%s907 + $0x30] sm:$0xff]
        %v915 = vld [vmem:[%s907 + $0x38] sm:$0xff]
        %v916 = vld [vmem:[%s907 + $0x40] sm:$0xff]
        %v917 = vld [vmem:[%s907 + $0x48] sm:$0xff]
        %v918 = vld [vmem:[%s907 + $0x50] sm:$0xff]
        %v919 = vld [vmem:[%s907 + $0x58] sm:$0xff]
        %v920 = vld [vmem:[%s907 + $0x60] sm:$0xff]
        %v921 = vld [vmem:[%s907 + $0x68] sm:$0xff]
        %v922 = vld [vmem:[%s907 + $0x70] sm:$0xff]
        %v923 = vld [vmem:[%s907 + $0x78] sm:$0xff]
        %924 = vmatpush.msra.mxu0 %v923
        %925 = vmatpush.msra.mxu0 %v922
        %926 = vmatpush.msra.mxu0 %v921
        %927 = vmatpush.msra.mxu0 %v920
        %928 = vmatpush.msra.mxu0 %v919
        %929 = vmatpush.msra.mxu0 %v918
        %930 = vmatpush.msra.mxu0 %v917
        %931 = vmatpush.msra.mxu0 %v916
        %932 = vmatpush.msra.mxu0 %v915
        %933 = vmatpush.msra.mxu0 %v914
        %934 = vmatpush.msra.mxu0 %v913
        %935 = vmatpush.msra.mxu0 %v912
        %936 = vmatpush.msra.mxu0 %v911
        %937 = vmatpush.msra.mxu0 %v910
        %938 = vmatpush.msra.mxu0 %v909
        %939 = vmatpush.msra.mxu0 %v908
        %940 = vmatmul.f32.gmra.mxu0 %v899
        %v941 = vpop.f32.mrf.mxu0
        %v942 = vadd.f32 0.0, %v941
        %943 = vmatmul.f32.gmra.mxu0 %v900
        %v944 = vpop.f32.mrf.mxu0
        %v945 = vadd.f32 0.0, %v944
        %946 = vmatmul.f32.gmra.mxu0 %v901
        %v947 = vpop.f32.mrf.mxu0
        %v948 = vadd.f32 0.0, %v947
        %949 = vmatmul.f32.gmra.mxu0 %v902
        %v950 = vpop.f32.mrf.mxu0
        %v951 = vadd.f32 0.0, %v950
        %952 = vmatmul.f32.gmra.mxu0 %v903
        %v953 = vpop.f32.mrf.mxu0
        %v954 = vadd.f32 0.0, %v953
        %955 = vmatmul.f32.gmra.mxu0 %v904
        %v956 = vpop.f32.mrf.mxu0
        %v957 = vadd.f32 0.0, %v956
        %958 = vmatmul.f32.gmra.mxu0 %v905
        %v959 = vpop.f32.mrf.mxu0
        %v960 = vadd.f32 0.0, %v959
        %961 = vmatmul.f32.gmra.mxu0 %v906
        %v962 = vpop.f32.mrf.mxu0
        %v963 = vadd.f32 0.0, %v962
        %964 = vdwg.mxu0
        %v965 = vadd.f32 %v890, %v942
        %v966 = vadd.f32 %v891, %v945
        %v967 = vadd.f32 %v892, %v948
        %v968 = vadd.f32 %v893, %v951
        %v969 = vadd.f32 %v894, %v954
        %v970 = vadd.f32 %v895, %v957
        %v971 = vadd.f32 %v896, %v960
        %v972 = vadd.f32 %v897, %v963
        %v973 = vld [vmem:[%s898 + $0x8] sm:$0xff]
        %v974 = vld [vmem:[%s898 + $0x10] sm:$0xff]
        %v975 = vld [vmem:[%s898 + $0x28] sm:$0xff]
        %v976 = vld [vmem:[%s898 + $0x30] sm:$0xff]
        %v977 = vld [vmem:[%s898 + $0x48] sm:$0xff]
        %v978 = vld [vmem:[%s898 + $0x50] sm:$0xff]
        %v979 = vld [vmem:[%s898 + $0x68] sm:$0xff]
        %v980 = vld [vmem:[%s898 + $0x70] sm:$0xff]
        %s981 = scalar_lea.vmem [#allocation3], 640
        %v982 = vld [vmem:[%s981] sm:$0xff]
        %v983 = vld [vmem:[%s981 + $0x8] sm:$0xff]
        %v984 = vld [vmem:[%s981 + $0x10] sm:$0xff]
        %v985 = vld [vmem:[%s981 + $0x18] sm:$0xff]
        %v986 = vld [vmem:[%s981 + $0x20] sm:$0xff]
        %v987 = vld [vmem:[%s981 + $0x28] sm:$0xff]
        %v988 = vld [vmem:[%s981 + $0x30] sm:$0xff]
        %v989 = vld [vmem:[%s981 + $0x38] sm:$0xff]
        %v990 = vld [vmem:[%s981 + $0x40] sm:$0xff]
        %v991 = vld [vmem:[%s981 + $0x48] sm:$0xff]
        %v992 = vld [vmem:[%s981 + $0x50] sm:$0xff]
        %v993 = vld [vmem:[%s981 + $0x58] sm:$0xff]
        %v994 = vld [vmem:[%s981 + $0x60] sm:$0xff]
        %v995 = vld [vmem:[%s981 + $0x68] sm:$0xff]
        %v996 = vld [vmem:[%s981 + $0x70] sm:$0xff]
        %v997 = vld [vmem:[%s981 + $0x78] sm:$0xff]
        %998 = vmatpush.msra.mxu0 %v997
        %999 = vmatpush.msra.mxu0 %v996
        %1000 = vmatpush.msra.mxu0 %v995
        %1001 = vmatpush.msra.mxu0 %v994
        %1002 = vmatpush.msra.mxu0 %v993
        %1003 = vmatpush.msra.mxu0 %v992
        %1004 = vmatpush.msra.mxu0 %v991
        %1005 = vmatpush.msra.mxu0 %v990
        %1006 = vmatpush.msra.mxu0 %v989
        %1007 = vmatpush.msra.mxu0 %v988
        %1008 = vmatpush.msra.mxu0 %v987
        %1009 = vmatpush.msra.mxu0 %v986
        %1010 = vmatpush.msra.mxu0 %v985
        %1011 = vmatpush.msra.mxu0 %v984
        %1012 = vmatpush.msra.mxu0 %v983
        %1013 = vmatpush.msra.mxu0 %v982
        %1014 = vmatmul.f32.gmra.mxu0 %v973
        %v1015 = vpop.f32.mrf.mxu0
        %v1016 = vadd.f32 0.0, %v1015
        %1017 = vmatmul.f32.gmra.mxu0 %v974
        %v1018 = vpop.f32.mrf.mxu0
        %v1019 = vadd.f32 0.0, %v1018
        %1020 = vmatmul.f32.gmra.mxu0 %v975
        %v1021 = vpop.f32.mrf.mxu0
        %v1022 = vadd.f32 0.0, %v1021
        %1023 = vmatmul.f32.gmra.mxu0 %v976
        %v1024 = vpop.f32.mrf.mxu0
        %v1025 = vadd.f32 0.0, %v1024
        %1026 = vmatmul.f32.gmra.mxu0 %v977
        %v1027 = vpop.f32.mrf.mxu0
        %v1028 = vadd.f32 0.0, %v1027
        %1029 = vmatmul.f32.gmra.mxu0 %v978
        %v1030 = vpop.f32.mrf.mxu0
        %v1031 = vadd.f32 0.0, %v1030
        %1032 = vmatmul.f32.gmra.mxu0 %v979
        %v1033 = vpop.f32.mrf.mxu0
        %v1034 = vadd.f32 0.0, %v1033
        %1035 = vmatmul.f32.gmra.mxu0 %v980
        %v1036 = vpop.f32.mrf.mxu0
        %v1037 = vadd.f32 0.0, %v1036
        %1038 = vdwg.mxu0
        %v1039 = vadd.f32 %v965, %v1016
        %v1040 = vadd.f32 %v966, %v1019
        %v1041 = vadd.f32 %v967, %v1022
        %v1042 = vadd.f32 %v968, %v1025
        %v1043 = vadd.f32 %v969, %v1028
        %v1044 = vadd.f32 %v970, %v1031
        %v1045 = vadd.f32 %v971, %v1034
        %v1046 = vadd.f32 %v972, %v1037
        %v1047 = vld [vmem:[%s898 + $0x9] sm:$0xff]
        %v1048 = vld [vmem:[%s898 + $0x11] sm:$0xff]
        %v1049 = vld [vmem:[%s898 + $0x29] sm:$0xff]
        %v1050 = vld [vmem:[%s898 + $0x31] sm:$0xff]
        %v1051 = vld [vmem:[%s898 + $0x49] sm:$0xff]
        %v1052 = vld [vmem:[%s898 + $0x51] sm:$0xff]
        %v1053 = vld [vmem:[%s898 + $0x69] sm:$0xff]
        %v1054 = vld [vmem:[%s898 + $0x71] sm:$0xff]
        %s1055 = scalar_lea.vmem [#allocation3], 1024
        %v1056 = vld [vmem:[%s1055] sm:$0xff]
        %v1057 = vld [vmem:[%s1055 + $0x8] sm:$0xff]
        %v1058 = vld [vmem:[%s1055 + $0x10] sm:$0xff]
        %v1059 = vld [vmem:[%s1055 + $0x18] sm:$0xff]
        %v1060 = vld [vmem:[%s1055 + $0x20] sm:$0xff]
        %v1061 = vld [vmem:[%s1055 + $0x28] sm:$0xff]
        %v1062 = vld [vmem:[%s1055 + $0x30] sm:$0xff]
        %v1063 = vld [vmem:[%s1055 + $0x38] sm:$0xff]
        %v1064 = vld [vmem:[%s1055 + $0x40] sm:$0xff]
        %v1065 = vld [vmem:[%s1055 + $0x48] sm:$0xff]
        %v1066 = vld [vmem:[%s1055 + $0x50] sm:$0xff]
        %v1067 = vld [vmem:[%s1055 + $0x58] sm:$0xff]
        %v1068 = vld [vmem:[%s1055 + $0x60] sm:$0xff]
        %v1069 = vld [vmem:[%s1055 + $0x68] sm:$0xff]
        %v1070 = vld [vmem:[%s1055 + $0x70] sm:$0xff]
        %v1071 = vld [vmem:[%s1055 + $0x78] sm:$0xff]
        %1072 = vmatpush.msra.mxu0 %v1071
        %1073 = vmatpush.msra.mxu0 %v1070
        %1074 = vmatpush.msra.mxu0 %v1069
        %1075 = vmatpush.msra.mxu0 %v1068
        %1076 = vmatpush.msra.mxu0 %v1067
        %1077 = vmatpush.msra.mxu0 %v1066
        %1078 = vmatpush.msra.mxu0 %v1065
        %1079 = vmatpush.msra.mxu0 %v1064
        %1080 = vmatpush.msra.mxu0 %v1063
        %1081 = vmatpush.msra.mxu0 %v1062
        %1082 = vmatpush.msra.mxu0 %v1061
        %1083 = vmatpush.msra.mxu0 %v1060
        %1084 = vmatpush.msra.mxu0 %v1059
        %1085 = vmatpush.msra.mxu0 %v1058
        %1086 = vmatpush.msra.mxu0 %v1057
        %1087 = vmatpush.msra.mxu0 %v1056
        %1088 = vmatmul.f32.gmra.mxu0 %v1047
        %v1089 = vpop.f32.mrf.mxu0
        %v1090 = vadd.f32 0.0, %v1089
        %1091 = vmatmul.f32.gmra.mxu0 %v1048
        %v1092 = vpop.f32.mrf.mxu0
        %v1093 = vadd.f32 0.0, %v1092
        %1094 = vmatmul.f32.gmra.mxu0 %v1049
        %v1095 = vpop.f32.mrf.mxu0
        %v1096 = vadd.f32 0.0, %v1095
        %1097 = vmatmul.f32.gmra.mxu0 %v1050
        %v1098 = vpop.f32.mrf.mxu0
        %v1099 = vadd.f32 0.0, %v1098
        %1100 = vmatmul.f32.gmra.mxu0 %v1051
        %v1101 = vpop.f32.mrf.mxu0
        %v1102 = vadd.f32 0.0, %v1101
        %1103 = vmatmul.f32.gmra.mxu0 %v1052
        %v1104 = vpop.f32.mrf.mxu0
        %v1105 = vadd.f32 0.0, %v1104
        %1106 = vmatmul.f32.gmra.mxu0 %v1053
        %v1107 = vpop.f32.mrf.mxu0
        %v1108 = vadd.f32 0.0, %v1107
        %1109 = vmatmul.f32.gmra.mxu0 %v1054
        %v1110 = vpop.f32.mrf.mxu0
        %v1111 = vadd.f32 0.0, %v1110
        %1112 = vdwg.mxu0
        %v1113 = vadd.f32 %v1039, %v1090
        %v1114 = vadd.f32 %v1040, %v1093
        %v1115 = vadd.f32 %v1041, %v1096
        %v1116 = vadd.f32 %v1042, %v1099
        %v1117 = vadd.f32 %v1043, %v1102
        %v1118 = vadd.f32 %v1044, %v1105
        %v1119 = vadd.f32 %v1045, %v1108
        %v1120 = vadd.f32 %v1046, %v1111
        %v1121 = vld [vmem:[%s4] sm:$0x1]
        %v1123 = vperm.slane %v1121, 0
        %v1125 = vmul.f32 %v1113, %v1123
        %v1126 = vmul.f32 %v1114, %v1123
        %v1127 = vmul.f32 %v1115, %v1123
        %v1128 = vmul.f32 %v1116, %v1123
        %v1129 = vmul.f32 %v1117, %v1123
        %v1130 = vmul.f32 %v1118, %v1123
        %v1131 = vmul.f32 %v1119, %v1123
        %v1132 = vmul.f32 %v1120, %v1123
        %v1133 = vld [vmem:[%s5] sm:$0x1]
        %v1135 = vperm.slane %v1133, 0
        %v1137 = vadd.f32 %v1125, %v1135
        %v1138 = vadd.f32 %v1126, %v1135
        %v1139 = vadd.f32 %v1127, %v1135
        %v1140 = vadd.f32 %v1128, %v1135
        %v1141 = vadd.f32 %v1129, %v1135
        %v1142 = vadd.f32 %v1130, %v1135
        %v1143 = vadd.f32 %v1131, %v1135
        %v1144 = vadd.f32 %v1132, %v1135
        %v1145 = vmax.f32 %v1137, 0.0
        %v1146 = vmax.f32 %v1138, 0.0
        %v1147 = vmax.f32 %v1139, 0.0
        %v1148 = vmax.f32 %v1140, 0.0
        %v1149 = vmax.f32 %v1141, 0.0
        %v1150 = vmax.f32 %v1142, 0.0
        %v1151 = vmax.f32 %v1143, 0.0
        %v1152 = vmax.f32 %v1144, 0.0
        %1153 = vst [vmem:[%s374 + $0x8] sm:$0xff] %v1145
        %1154 = vst [vmem:[%s374 + $0x10] sm:$0xff] %v1146
        %1155 = vst [vmem:[%s374 + $0x28] sm:$0xff] %v1147
        %1156 = vst [vmem:[%s374 + $0x30] sm:$0xff] %v1148
        %1157 = vst [vmem:[%s374 + $0x48] sm:$0xff] %v1149
        %1158 = vst [vmem:[%s374 + $0x50] sm:$0xff] %v1150
        %1159 = vst [vmem:[%s374 + $0x68] sm:$0xff] %v1151
        %1160 = vst [vmem:[%s374 + $0x70] sm:$0xff] %v1152
        %v1161 = vld [vmem:[#allocation2 + $0x7] sm:$0xff]
        %v1162 = vld [vmem:[#allocation2 + $0xf] sm:$0xff]
        %v1163 = vld [vmem:[#allocation2 + $0x27] sm:$0xff]
        %v1164 = vld [vmem:[#allocation2 + $0x2f] sm:$0xff]
        %v1165 = vld [vmem:[#allocation2 + $0x47] sm:$0xff]
        %v1166 = vld [vmem:[#allocation2 + $0x4f] sm:$0xff]
        %v1167 = vld [vmem:[#allocation2 + $0x67] sm:$0xff]
        %v1168 = vld [vmem:[#allocation2 + $0x6f] sm:$0xff]
        %v1169 = vld [vmem:[#allocation6] sm:$0xff]
        %v1170 = vld [vmem:[#allocation6 + $0x8] sm:$0xff]
        %v1171 = vld [vmem:[#allocation6 + $0x10] sm:$0xff]
        %v1172 = vld [vmem:[#allocation6 + $0x18] sm:$0xff]
        %v1173 = vld [vmem:[#allocation6 + $0x20] sm:$0xff]
        %v1174 = vld [vmem:[#allocation6 + $0x28] sm:$0xff]
        %v1175 = vld [vmem:[#allocation6 + $0x30] sm:$0xff]
        %v1176 = vld [vmem:[#allocation6 + $0x38] sm:$0xff]
        %v1177 = vld [vmem:[#allocation6 + $0x40] sm:$0xff]
        %v1178 = vld [vmem:[#allocation6 + $0x48] sm:$0xff]
        %v1179 = vld [vmem:[#allocation6 + $0x50] sm:$0xff]
        %v1180 = vld [vmem:[#allocation6 + $0x58] sm:$0xff]
        %v1181 = vld [vmem:[#allocation6 + $0x60] sm:$0xff]
        %v1182 = vld [vmem:[#allocation6 + $0x68] sm:$0xff]
        %v1183 = vld [vmem:[#allocation6 + $0x70] sm:$0xff]
        %v1184 = vld [vmem:[#allocation6 + $0x78] sm:$0xff]
        %v1185 = vld [vmem:[#allocation2 + $0x8] sm:$0xff]
        %v1186 = vld [vmem:[#allocation2 + $0x10] sm:$0xff]
        %v1187 = vld [vmem:[#allocation2 + $0x28] sm:$0xff]
        %v1188 = vld [vmem:[#allocation2 + $0x30] sm:$0xff]
        %v1189 = vld [vmem:[#allocation2 + $0x48] sm:$0xff]
        %v1190 = vld [vmem:[#allocation2 + $0x50] sm:$0xff]
        %v1191 = vld [vmem:[#allocation2 + $0x68] sm:$0xff]
        %v1192 = vld [vmem:[#allocation2 + $0x70] sm:$0xff]
        %s1193 = scalar_lea.vmem [#allocation6], 384
        %v1194 = vld [vmem:[%s1193] sm:$0xff]
        %v1195 = vld [vmem:[%s1193 + $0x8] sm:$0xff]
        %v1196 = vld [vmem:[%s1193 + $0x10] sm:$0xff]
        %v1197 = vld [vmem:[%s1193 + $0x18] sm:$0xff]
        %v1198 = vld [vmem:[%s1193 + $0x20] sm:$0xff]
        %v1199 = vld [vmem:[%s1193 + $0x28] sm:$0xff]
        %v1200 = vld [vmem:[%s1193 + $0x30] sm:$0xff]
        %v1201 = vld [vmem:[%s1193 + $0x38] sm:$0xff]
        %v1202 = vld [vmem:[%s1193 + $0x40] sm:$0xff]
        %v1203 = vld [vmem:[%s1193 + $0x48] sm:$0xff]
        %v1204 = vld [vmem:[%s1193 + $0x50] sm:$0xff]
        %v1205 = vld [vmem:[%s1193 + $0x58] sm:$0xff]
        %v1206 = vld [vmem:[%s1193 + $0x60] sm:$0xff]
        %v1207 = vld [vmem:[%s1193 + $0x68] sm:$0xff]
        %v1208 = vld [vmem:[%s1193 + $0x70] sm:$0xff]
        %v1209 = vld [vmem:[%s1193 + $0x78] sm:$0xff]
        %1210 = vmatpush.msra.mxu0 %v1209
        %1211 = vmatpush.msra.mxu0 %v1208
        %1212 = vmatpush.msra.mxu0 %v1207
        %1213 = vmatpush.msra.mxu0 %v1206
        %1214 = vmatpush.msra.mxu0 %v1205
        %1215 = vmatpush.msra.mxu0 %v1204
        %1216 = vmatpush.msra.mxu0 %v1203
        %1217 = vmatpush.msra.mxu0 %v1202
        %1218 = vmatpush.msra.mxu0 %v1201
        %1219 = vmatpush.msra.mxu0 %v1200
        %1220 = vmatpush.msra.mxu0 %v1199
        %1221 = vmatpush.msra.mxu0 %v1198
        %1222 = vmatpush.msra.mxu0 %v1197
        %1223 = vmatpush.msra.mxu0 %v1196
        %1224 = vmatpush.msra.mxu0 %v1195
        %1225 = vmatpush.msra.mxu0 %v1194
        %1226 = vmatmul.f32.gmra.mxu0 %v1185
        %v1227 = vpop.f32.mrf.mxu0
        %v1228 = vadd.f32 0.0, %v1227
        %1229 = vmatmul.f32.gmra.mxu0 %v1186
        %v1230 = vpop.f32.mrf.mxu0
        %v1231 = vadd.f32 0.0, %v1230
        %1232 = vmatmul.f32.gmra.mxu0 %v1187
        %v1233 = vpop.f32.mrf.mxu0
        %v1234 = vadd.f32 0.0, %v1233
        %1235 = vmatmul.f32.gmra.mxu0 %v1188
        %v1236 = vpop.f32.mrf.mxu0
        %v1237 = vadd.f32 0.0, %v1236
        %1238 = vmatmul.f32.gmra.mxu0 %v1189
        %v1239 = vpop.f32.mrf.mxu0
        %v1240 = vadd.f32 0.0, %v1239
        %1241 = vmatmul.f32.gmra.mxu0 %v1190
        %v1242 = vpop.f32.mrf.mxu0
        %v1243 = vadd.f32 0.0, %v1242
        %1244 = vmatmul.f32.gmra.mxu0 %v1191
        %v1245 = vpop.f32.mrf.mxu0
        %v1246 = vadd.f32 0.0, %v1245
        %1247 = vmatmul.f32.gmra.mxu0 %v1192
        %v1248 = vpop.f32.mrf.mxu0
        %v1249 = vadd.f32 0.0, %v1248
        %1250 = vdwg.mxu0
        %1251 = vmatpush.msra.mxu0 %v1184
        %1252 = vmatpush.msra.mxu0 %v1183
        %1253 = vmatpush.msra.mxu0 %v1182
        %1254 = vmatpush.msra.mxu0 %v1181
        %1255 = vmatpush.msra.mxu0 %v1180
        %1256 = vmatpush.msra.mxu0 %v1179
        %1257 = vmatpush.msra.mxu0 %v1178
        %1258 = vmatpush.msra.mxu0 %v1177
        %1259 = vmatpush.msra.mxu0 %v1176
        %1260 = vmatpush.msra.mxu0 %v1175
        %1261 = vmatpush.msra.mxu0 %v1174
        %1262 = vmatpush.msra.mxu0 %v1173
        %1263 = vmatpush.msra.mxu0 %v1172
        %1264 = vmatpush.msra.mxu0 %v1171
        %1265 = vmatpush.msra.mxu0 %v1170
        %1266 = vmatpush.msra.mxu0 %v1169
        %1267 = vmatmul.f32.gmra.mxu0 %v1161
        %v1268 = vpop.f32.mrf.mxu0
        %v1269 = vadd.f32 %v1228, %v1268
        %1270 = vmatmul.f32.gmra.mxu0 %v1162
        %v1271 = vpop.f32.mrf.mxu0
        %v1272 = vadd.f32 %v1231, %v1271
        %1273 = vmatmul.f32.gmra.mxu0 %v1163
        %v1274 = vpop.f32.mrf.mxu0
        %v1275 = vadd.f32 %v1234, %v1274
        %1276 = vmatmul.f32.gmra.mxu0 %v1164
        %v1277 = vpop.f32.mrf.mxu0
        %v1278 = vadd.f32 %v1237, %v1277
        %1279 = vmatmul.f32.gmra.mxu0 %v1165
        %v1280 = vpop.f32.mrf.mxu0
        %v1281 = vadd.f32 %v1240, %v1280
        %1282 = vmatmul.f32.gmra.mxu0 %v1166
        %v1283 = vpop.f32.mrf.mxu0
        %v1284 = vadd.f32 %v1243, %v1283
        %1285 = vmatmul.f32.gmra.mxu0 %v1167
        %v1286 = vpop.f32.mrf.mxu0
        %v1287 = vadd.f32 %v1246, %v1286
        %1288 = vmatmul.f32.gmra.mxu0 %v1168
        %v1289 = vpop.f32.mrf.mxu0
        %v1290 = vadd.f32 %v1249, %v1289
        %1291 = vdwg.mxu0
        %v1292 = vld [vmem:[#allocation2 + $0x9] sm:$0xff]
        %v1293 = vld [vmem:[#allocation2 + $0x11] sm:$0xff]
        %v1294 = vld [vmem:[#allocation2 + $0x29] sm:$0xff]
        %v1295 = vld [vmem:[#allocation2 + $0x31] sm:$0xff]
        %v1296 = vld [vmem:[#allocation2 + $0x49] sm:$0xff]
        %v1297 = vld [vmem:[#allocation2 + $0x51] sm:$0xff]
        %v1298 = vld [vmem:[#allocation2 + $0x69] sm:$0xff]
        %v1299 = vld [vmem:[#allocation2 + $0x71] sm:$0xff]
        %s1300 = scalar_lea.vmem [#allocation6], 768
        %v1301 = vld [vmem:[%s1300] sm:$0xff]
        %v1302 = vld [vmem:[%s1300 + $0x8] sm:$0xff]
        %v1303 = vld [vmem:[%s1300 + $0x10] sm:$0xff]
        %v1304 = vld [vmem:[%s1300 + $0x18] sm:$0xff]
        %v1305 = vld [vmem:[%s1300 + $0x20] sm:$0xff]
        %v1306 = vld [vmem:[%s1300 + $0x28] sm:$0xff]
        %v1307 = vld [vmem:[%s1300 + $0x30] sm:$0xff]
        %v1308 = vld [vmem:[%s1300 + $0x38] sm:$0xff]
        %v1309 = vld [vmem:[%s1300 + $0x40] sm:$0xff]
        %v1310 = vld [vmem:[%s1300 + $0x48] sm:$0xff]
        %v1311 = vld [vmem:[%s1300 + $0x50] sm:$0xff]
        %v1312 = vld [vmem:[%s1300 + $0x58] sm:$0xff]
        %v1313 = vld [vmem:[%s1300 + $0x60] sm:$0xff]
        %v1314 = vld [vmem:[%s1300 + $0x68] sm:$0xff]
        %v1315 = vld [vmem:[%s1300 + $0x70] sm:$0xff]
        %v1316 = vld [vmem:[%s1300 + $0x78] sm:$0xff]
        %1317 = vmatpush.msra.mxu0 %v1316
        %1318 = vmatpush.msra.mxu0 %v1315
        %1319 = vmatpush.msra.mxu0 %v1314
        %1320 = vmatpush.msra.mxu0 %v1313
        %1321 = vmatpush.msra.mxu0 %v1312
        %1322 = vmatpush.msra.mxu0 %v1311
        %1323 = vmatpush.msra.mxu0 %v1310
        %1324 = vmatpush.msra.mxu0 %v1309
        %1325 = vmatpush.msra.mxu0 %v1308
        %1326 = vmatpush.msra.mxu0 %v1307
        %1327 = vmatpush.msra.mxu0 %v1306
        %1328 = vmatpush.msra.mxu0 %v1305
        %1329 = vmatpush.msra.mxu0 %v1304
        %1330 = vmatpush.msra.mxu0 %v1303
        %1331 = vmatpush.msra.mxu0 %v1302
        %1332 = vmatpush.msra.mxu0 %v1301
        %1333 = vmatmul.f32.gmra.mxu0 %v1292
        %v1334 = vpop.f32.mrf.mxu0
        %v1335 = vadd.f32 0.0, %v1334
        %1336 = vmatmul.f32.gmra.mxu0 %v1293
        %v1337 = vpop.f32.mrf.mxu0
        %v1338 = vadd.f32 0.0, %v1337
        %1339 = vmatmul.f32.gmra.mxu0 %v1294
        %v1340 = vpop.f32.mrf.mxu0
        %v1341 = vadd.f32 0.0, %v1340
        %1342 = vmatmul.f32.gmra.mxu0 %v1295
        %v1343 = vpop.f32.mrf.mxu0
        %v1344 = vadd.f32 0.0, %v1343
        %1345 = vmatmul.f32.gmra.mxu0 %v1296
        %v1346 = vpop.f32.mrf.mxu0
        %v1347 = vadd.f32 0.0, %v1346
        %1348 = vmatmul.f32.gmra.mxu0 %v1297
        %v1349 = vpop.f32.mrf.mxu0
        %v1350 = vadd.f32 0.0, %v1349
        %1351 = vmatmul.f32.gmra.mxu0 %v1298
        %v1352 = vpop.f32.mrf.mxu0
        %v1353 = vadd.f32 0.0, %v1352
        %1354 = vmatmul.f32.gmra.mxu0 %v1299
        %v1355 = vpop.f32.mrf.mxu0
        %v1356 = vadd.f32 0.0, %v1355
        %1357 = vdwg.mxu0
        %v1358 = vadd.f32 %v1269, %v1335
        %v1359 = vadd.f32 %v1272, %v1338
        %v1360 = vadd.f32 %v1275, %v1341
        %v1361 = vadd.f32 %v1278, %v1344
        %v1362 = vadd.f32 %v1281, %v1347
        %v1363 = vadd.f32 %v1284, %v1350
        %v1364 = vadd.f32 %v1287, %v1353
        %v1365 = vadd.f32 %v1290, %v1356
        %v1366 = vld [vmem:[%s374 + $0x7] sm:$0xff]
        %v1367 = vld [vmem:[%s374 + $0xf] sm:$0xff]
        %v1368 = vld [vmem:[%s374 + $0x27] sm:$0xff]
        %v1369 = vld [vmem:[%s374 + $0x2f] sm:$0xff]
        %v1370 = vld [vmem:[%s374 + $0x47] sm:$0xff]
        %v1371 = vld [vmem:[%s374 + $0x4f] sm:$0xff]
        %v1372 = vld [vmem:[%s374 + $0x67] sm:$0xff]
        %v1373 = vld [vmem:[%s374 + $0x6f] sm:$0xff]
        %s1374 = scalar_lea.vmem [#allocation6], 128
        %v1375 = vld [vmem:[%s1374] sm:$0xff]
        %v1376 = vld [vmem:[%s1374 + $0x8] sm:$0xff]
        %v1377 = vld [vmem:[%s1374 + $0x10] sm:$0xff]
        %v1378 = vld [vmem:[%s1374 + $0x18] sm:$0xff]
        %v1379 = vld [vmem:[%s1374 + $0x20] sm:$0xff]
        %v1380 = vld [vmem:[%s1374 + $0x28] sm:$0xff]
        %v1381 = vld [vmem:[%s1374 + $0x30] sm:$0xff]
        %v1382 = vld [vmem:[%s1374 + $0x38] sm:$0xff]
        %v1383 = vld [vmem:[%s1374 + $0x40] sm:$0xff]
        %v1384 = vld [vmem:[%s1374 + $0x48] sm:$0xff]
        %v1385 = vld [vmem:[%s1374 + $0x50] sm:$0xff]
        %v1386 = vld [vmem:[%s1374 + $0x58] sm:$0xff]
        %v1387 = vld [vmem:[%s1374 + $0x60] sm:$0xff]
        %v1388 = vld [vmem:[%s1374 + $0x68] sm:$0xff]
        %v1389 = vld [vmem:[%s1374 + $0x70] sm:$0xff]
        %v1390 = vld [vmem:[%s1374 + $0x78] sm:$0xff]
        %1391 = vmatpush.msra.mxu0 %v1390
        %1392 = vmatpush.msra.mxu0 %v1389
        %1393 = vmatpush.msra.mxu0 %v1388
        %1394 = vmatpush.msra.mxu0 %v1387
        %1395 = vmatpush.msra.mxu0 %v1386
        %1396 = vmatpush.msra.mxu0 %v1385
        %1397 = vmatpush.msra.mxu0 %v1384
        %1398 = vmatpush.msra.mxu0 %v1383
        %1399 = vmatpush.msra.mxu0 %v1382
        %1400 = vmatpush.msra.mxu0 %v1381
        %1401 = vmatpush.msra.mxu0 %v1380
        %1402 = vmatpush.msra.mxu0 %v1379
        %1403 = vmatpush.msra.mxu0 %v1378
        %1404 = vmatpush.msra.mxu0 %v1377
        %1405 = vmatpush.msra.mxu0 %v1376
        %1406 = vmatpush.msra.mxu0 %v1375
        %1407 = vmatmul.f32.gmra.mxu0 %v1366
        %v1408 = vpop.f32.mrf.mxu0
        %v1409 = vadd.f32 0.0, %v1408
        %1410 = vmatmul.f32.gmra.mxu0 %v1367
        %v1411 = vpop.f32.mrf.mxu0
        %v1412 = vadd.f32 0.0, %v1411
        %1413 = vmatmul.f32.gmra.mxu0 %v1368
        %v1414 = vpop.f32.mrf.mxu0
        %v1415 = vadd.f32 0.0, %v1414
        %1416 = vmatmul.f32.gmra.mxu0 %v1369
        %v1417 = vpop.f32.mrf.mxu0
        %v1418 = vadd.f32 0.0, %v1417
        %1419 = vmatmul.f32.gmra.mxu0 %v1370
        %v1420 = vpop.f32.mrf.mxu0
        %v1421 = vadd.f32 0.0, %v1420
        %1422 = vmatmul.f32.gmra.mxu0 %v1371
        %v1423 = vpop.f32.mrf.mxu0
        %v1424 = vadd.f32 0.0, %v1423
        %1425 = vmatmul.f32.gmra.mxu0 %v1372
        %v1426 = vpop.f32.mrf.mxu0
        %v1427 = vadd.f32 0.0, %v1426
        %1428 = vmatmul.f32.gmra.mxu0 %v1373
        %v1429 = vpop.f32.mrf.mxu0
        %v1430 = vadd.f32 0.0, %v1429
        %1431 = vdwg.mxu0
        %v1432 = vadd.f32 %v1358, %v1409
        %v1433 = vadd.f32 %v1359, %v1412
        %v1434 = vadd.f32 %v1360, %v1415
        %v1435 = vadd.f32 %v1361, %v1418
        %v1436 = vadd.f32 %v1362, %v1421
        %v1437 = vadd.f32 %v1363, %v1424
        %v1438 = vadd.f32 %v1364, %v1427
        %v1439 = vadd.f32 %v1365, %v1430
        %v1440 = vld [vmem:[%s374 + $0x8] sm:$0xff]
        %v1441 = vld [vmem:[%s374 + $0x10] sm:$0xff]
        %v1442 = vld [vmem:[%s374 + $0x28] sm:$0xff]
        %v1443 = vld [vmem:[%s374 + $0x30] sm:$0xff]
        %v1444 = vld [vmem:[%s374 + $0x48] sm:$0xff]
        %v1445 = vld [vmem:[%s374 + $0x50] sm:$0xff]
        %v1446 = vld [vmem:[%s374 + $0x68] sm:$0xff]
        %v1447 = vld [vmem:[%s374 + $0x70] sm:$0xff]
        %s1448 = scalar_lea.vmem [#allocation6], 512
        %v1449 = vld [vmem:[%s1448] sm:$0xff]
        %v1450 = vld [vmem:[%s1448 + $0x8] sm:$0xff]
        %v1451 = vld [vmem:[%s1448 + $0x10] sm:$0xff]
        %v1452 = vld [vmem:[%s1448 + $0x18] sm:$0xff]
        %v1453 = vld [vmem:[%s1448 + $0x20] sm:$0xff]
        %v1454 = vld [vmem:[%s1448 + $0x28] sm:$0xff]
        %v1455 = vld [vmem:[%s1448 + $0x30] sm:$0xff]
        %v1456 = vld [vmem:[%s1448 + $0x38] sm:$0xff]
        %v1457 = vld [vmem:[%s1448 + $0x40] sm:$0xff]
        %v1458 = vld [vmem:[%s1448 + $0x48] sm:$0xff]
        %v1459 = vld [vmem:[%s1448 + $0x50] sm:$0xff]
        %v1460 = vld [vmem:[%s1448 + $0x58] sm:$0xff]
        %v1461 = vld [vmem:[%s1448 + $0x60] sm:$0xff]
        %v1462 = vld [vmem:[%s1448 + $0x68] sm:$0xff]
        %v1463 = vld [vmem:[%s1448 + $0x70] sm:$0xff]
        %v1464 = vld [vmem:[%s1448 + $0x78] sm:$0xff]
        %1465 = vmatpush.msra.mxu0 %v1464
        %1466 = vmatpush.msra.mxu0 %v1463
        %1467 = vmatpush.msra.mxu0 %v1462
        %1468 = vmatpush.msra.mxu0 %v1461
        %1469 = vmatpush.msra.mxu0 %v1460
        %1470 = vmatpush.msra.mxu0 %v1459
        %1471 = vmatpush.msra.mxu0 %v1458
        %1472 = vmatpush.msra.mxu0 %v1457
        %1473 = vmatpush.msra.mxu0 %v1456
        %1474 = vmatpush.msra.mxu0 %v1455
        %1475 = vmatpush.msra.mxu0 %v1454
        %1476 = vmatpush.msra.mxu0 %v1453
        %1477 = vmatpush.msra.mxu0 %v1452
        %1478 = vmatpush.msra.mxu0 %v1451
        %1479 = vmatpush.msra.mxu0 %v1450
        %1480 = vmatpush.msra.mxu0 %v1449
        %1481 = vmatmul.f32.gmra.mxu0 %v1440
        %v1482 = vpop.f32.mrf.mxu0
        %v1483 = vadd.f32 0.0, %v1482
        %1484 = vmatmul.f32.gmra.mxu0 %v1441
        %v1485 = vpop.f32.mrf.mxu0
        %v1486 = vadd.f32 0.0, %v1485
        %1487 = vmatmul.f32.gmra.mxu0 %v1442
        %v1488 = vpop.f32.mrf.mxu0
        %v1489 = vadd.f32 0.0, %v1488
        %1490 = vmatmul.f32.gmra.mxu0 %v1443
        %v1491 = vpop.f32.mrf.mxu0
        %v1492 = vadd.f32 0.0, %v1491
        %1493 = vmatmul.f32.gmra.mxu0 %v1444
        %v1494 = vpop.f32.mrf.mxu0
        %v1495 = vadd.f32 0.0, %v1494
        %1496 = vmatmul.f32.gmra.mxu0 %v1445
        %v1497 = vpop.f32.mrf.mxu0
        %v1498 = vadd.f32 0.0, %v1497
        %1499 = vmatmul.f32.gmra.mxu0 %v1446
        %v1500 = vpop.f32.mrf.mxu0
        %v1501 = vadd.f32 0.0, %v1500
        %1502 = vmatmul.f32.gmra.mxu0 %v1447
        %v1503 = vpop.f32.mrf.mxu0
        %v1504 = vadd.f32 0.0, %v1503
        %1505 = vdwg.mxu0
        %v1506 = vadd.f32 %v1432, %v1483
        %v1507 = vadd.f32 %v1433, %v1486
        %v1508 = vadd.f32 %v1434, %v1489
        %v1509 = vadd.f32 %v1435, %v1492
        %v1510 = vadd.f32 %v1436, %v1495
        %v1511 = vadd.f32 %v1437, %v1498
        %v1512 = vadd.f32 %v1438, %v1501
        %v1513 = vadd.f32 %v1439, %v1504
        %v1514 = vld [vmem:[%s374 + $0x9] sm:$0xff]
        %v1515 = vld [vmem:[%s374 + $0x11] sm:$0xff]
        %v1516 = vld [vmem:[%s374 + $0x29] sm:$0xff]
        %v1517 = vld [vmem:[%s374 + $0x31] sm:$0xff]
        %v1518 = vld [vmem:[%s374 + $0x49] sm:$0xff]
        %v1519 = vld [vmem:[%s374 + $0x51] sm:$0xff]
        %v1520 = vld [vmem:[%s374 + $0x69] sm:$0xff]
        %v1521 = vld [vmem:[%s374 + $0x71] sm:$0xff]
        %s1522 = scalar_lea.vmem [#allocation6], 896
        %v1523 = vld [vmem:[%s1522] sm:$0xff]
        %v1524 = vld [vmem:[%s1522 + $0x8] sm:$0xff]
        %v1525 = vld [vmem:[%s1522 + $0x10] sm:$0xff]
        %v1526 = vld [vmem:[%s1522 + $0x18] sm:$0xff]
        %v1527 = vld [vmem:[%s1522 + $0x20] sm:$0xff]
        %v1528 = vld [vmem:[%s1522 + $0x28] sm:$0xff]
        %v1529 = vld [vmem:[%s1522 + $0x30] sm:$0xff]
        %v1530 = vld [vmem:[%s1522 + $0x38] sm:$0xff]
        %v1531 = vld [vmem:[%s1522 + $0x40] sm:$0xff]
        %v1532 = vld [vmem:[%s1522 + $0x48] sm:$0xff]
        %v1533 = vld [vmem:[%s1522 + $0x50] sm:$0xff]
        %v1534 = vld [vmem:[%s1522 + $0x58] sm:$0xff]
        %v1535 = vld [vmem:[%s1522 + $0x60] sm:$0xff]
        %v1536 = vld [vmem:[%s1522 + $0x68] sm:$0xff]
        %v1537 = vld [vmem:[%s1522 + $0x70] sm:$0xff]
        %v1538 = vld [vmem:[%s1522 + $0x78] sm:$0xff]
        %1539 = vmatpush.msra.mxu0 %v1538
        %1540 = vmatpush.msra.mxu0 %v1537
        %1541 = vmatpush.msra.mxu0 %v1536
        %1542 = vmatpush.msra.mxu0 %v1535
        %1543 = vmatpush.msra.mxu0 %v1534
        %1544 = vmatpush.msra.mxu0 %v1533
        %1545 = vmatpush.msra.mxu0 %v1532
        %1546 = vmatpush.msra.mxu0 %v1531
        %1547 = vmatpush.msra.mxu0 %v1530
        %1548 = vmatpush.msra.mxu0 %v1529
        %1549 = vmatpush.msra.mxu0 %v1528
        %1550 = vmatpush.msra.mxu0 %v1527
        %1551 = vmatpush.msra.mxu0 %v1526
        %1552 = vmatpush.msra.mxu0 %v1525
        %1553 = vmatpush.msra.mxu0 %v1524
        %1554 = vmatpush.msra.mxu0 %v1523
        %1555 = vmatmul.f32.gmra.mxu0 %v1514
        %v1556 = vpop.f32.mrf.mxu0
        %v1557 = vadd.f32 0.0, %v1556
        %1558 = vmatmul.f32.gmra.mxu0 %v1515
        %v1559 = vpop.f32.mrf.mxu0
        %v1560 = vadd.f32 0.0, %v1559
        %1561 = vmatmul.f32.gmra.mxu0 %v1516
        %v1562 = vpop.f32.mrf.mxu0
        %v1563 = vadd.f32 0.0, %v1562
        %1564 = vmatmul.f32.gmra.mxu0 %v1517
        %v1565 = vpop.f32.mrf.mxu0
        %v1566 = vadd.f32 0.0, %v1565
        %1567 = vmatmul.f32.gmra.mxu0 %v1518
        %v1568 = vpop.f32.mrf.mxu0
        %v1569 = vadd.f32 0.0, %v1568
        %1570 = vmatmul.f32.gmra.mxu0 %v1519
        %v1571 = vpop.f32.mrf.mxu0
        %v1572 = vadd.f32 0.0, %v1571
        %1573 = vmatmul.f32.gmra.mxu0 %v1520
        %v1574 = vpop.f32.mrf.mxu0
        %v1575 = vadd.f32 0.0, %v1574
        %1576 = vmatmul.f32.gmra.mxu0 %v1521
        %v1577 = vpop.f32.mrf.mxu0
        %v1578 = vadd.f32 0.0, %v1577
        %1579 = vdwg.mxu0
        %v1580 = vadd.f32 %v1506, %v1557
        %v1581 = vadd.f32 %v1507, %v1560
        %v1582 = vadd.f32 %v1508, %v1563
        %v1583 = vadd.f32 %v1509, %v1566
        %v1584 = vadd.f32 %v1510, %v1569
        %v1585 = vadd.f32 %v1511, %v1572
        %v1586 = vadd.f32 %v1512, %v1575
        %v1587 = vadd.f32 %v1513, %v1578
        %v1588 = vld [vmem:[%s898 + $0x7] sm:$0xff]
        %v1589 = vld [vmem:[%s898 + $0xf] sm:$0xff]
        %v1590 = vld [vmem:[%s898 + $0x27] sm:$0xff]
        %v1591 = vld [vmem:[%s898 + $0x2f] sm:$0xff]
        %v1592 = vld [vmem:[%s898 + $0x47] sm:$0xff]
        %v1593 = vld [vmem:[%s898 + $0x4f] sm:$0xff]
        %v1594 = vld [vmem:[%s898 + $0x67] sm:$0xff]
        %v1595 = vld [vmem:[%s898 + $0x6f] sm:$0xff]
        %s1596 = scalar_lea.vmem [#allocation6], 256
        %v1597 = vld [vmem:[%s1596] sm:$0xff]
        %v1598 = vld [vmem:[%s1596 + $0x8] sm:$0xff]
        %v1599 = vld [vmem:[%s1596 + $0x10] sm:$0xff]
        %v1600 = vld [vmem:[%s1596 + $0x18] sm:$0xff]
        %v1601 = vld [vmem:[%s1596 + $0x20] sm:$0xff]
        %v1602 = vld [vmem:[%s1596 + $0x28] sm:$0xff]
        %v1603 = vld [vmem:[%s1596 + $0x30] sm:$0xff]
        %v1604 = vld [vmem:[%s1596 + $0x38] sm:$0xff]
        %v1605 = vld [vmem:[%s1596 + $0x40] sm:$0xff]
        %v1606 = vld [vmem:[%s1596 + $0x48] sm:$0xff]
        %v1607 = vld [vmem:[%s1596 + $0x50] sm:$0xff]
        %v1608 = vld [vmem:[%s1596 + $0x58] sm:$0xff]
        %v1609 = vld [vmem:[%s1596 + $0x60] sm:$0xff]
        %v1610 = vld [vmem:[%s1596 + $0x68] sm:$0xff]
        %v1611 = vld [vmem:[%s1596 + $0x70] sm:$0xff]
        %v1612 = vld [vmem:[%s1596 + $0x78] sm:$0xff]
        %1613 = vmatpush.msra.mxu0 %v1612
        %1614 = vmatpush.msra.mxu0 %v1611
        %1615 = vmatpush.msra.mxu0 %v1610
        %1616 = vmatpush.msra.mxu0 %v1609
        %1617 = vmatpush.msra.mxu0 %v1608
        %1618 = vmatpush.msra.mxu0 %v1607
        %1619 = vmatpush.msra.mxu0 %v1606
        %1620 = vmatpush.msra.mxu0 %v1605
        %1621 = vmatpush.msra.mxu0 %v1604
        %1622 = vmatpush.msra.mxu0 %v1603
        %1623 = vmatpush.msra.mxu0 %v1602
        %1624 = vmatpush.msra.mxu0 %v1601
        %1625 = vmatpush.msra.mxu0 %v1600
        %1626 = vmatpush.msra.mxu0 %v1599
        %1627 = vmatpush.msra.mxu0 %v1598
        %1628 = vmatpush.msra.mxu0 %v1597
        %1629 = vmatmul.f32.gmra.mxu0 %v1588
        %v1630 = vpop.f32.mrf.mxu0
        %v1631 = vadd.f32 0.0, %v1630
        %1632 = vmatmul.f32.gmra.mxu0 %v1589
        %v1633 = vpop.f32.mrf.mxu0
        %v1634 = vadd.f32 0.0, %v1633
        %1635 = vmatmul.f32.gmra.mxu0 %v1590
        %v1636 = vpop.f32.mrf.mxu0
        %v1637 = vadd.f32 0.0, %v1636
        %1638 = vmatmul.f32.gmra.mxu0 %v1591
        %v1639 = vpop.f32.mrf.mxu0
        %v1640 = vadd.f32 0.0, %v1639
        %1641 = vmatmul.f32.gmra.mxu0 %v1592
        %v1642 = vpop.f32.mrf.mxu0
        %v1643 = vadd.f32 0.0, %v1642
        %1644 = vmatmul.f32.gmra.mxu0 %v1593
        %v1645 = vpop.f32.mrf.mxu0
        %v1646 = vadd.f32 0.0, %v1645
        %1647 = vmatmul.f32.gmra.mxu0 %v1594
        %v1648 = vpop.f32.mrf.mxu0
        %v1649 = vadd.f32 0.0, %v1648
        %1650 = vmatmul.f32.gmra.mxu0 %v1595
        %v1651 = vpop.f32.mrf.mxu0
        %v1652 = vadd.f32 0.0, %v1651
        %1653 = vdwg.mxu0
        %v1654 = vadd.f32 %v1580, %v1631
        %v1655 = vadd.f32 %v1581, %v1634
        %v1656 = vadd.f32 %v1582, %v1637
        %v1657 = vadd.f32 %v1583, %v1640
        %v1658 = vadd.f32 %v1584, %v1643
        %v1659 = vadd.f32 %v1585, %v1646
        %v1660 = vadd.f32 %v1586, %v1649
        %v1661 = vadd.f32 %v1587, %v1652
        %v1662 = vld [vmem:[%s898 + $0x8] sm:$0xff]
        %v1663 = vld [vmem:[%s898 + $0x10] sm:$0xff]
        %v1664 = vld [vmem:[%s898 + $0x28] sm:$0xff]
        %v1665 = vld [vmem:[%s898 + $0x30] sm:$0xff]
        %v1666 = vld [vmem:[%s898 + $0x48] sm:$0xff]
        %v1667 = vld [vmem:[%s898 + $0x50] sm:$0xff]
        %v1668 = vld [vmem:[%s898 + $0x68] sm:$0xff]
        %v1669 = vld [vmem:[%s898 + $0x70] sm:$0xff]
        %s1670 = scalar_lea.vmem [#allocation6], 640
        %v1671 = vld [vmem:[%s1670] sm:$0xff]
        %v1672 = vld [vmem:[%s1670 + $0x8] sm:$0xff]
        %v1673 = vld [vmem:[%s1670 + $0x10] sm:$0xff]
        %v1674 = vld [vmem:[%s1670 + $0x18] sm:$0xff]
        %v1675 = vld [vmem:[%s1670 + $0x20] sm:$0xff]
        %v1676 = vld [vmem:[%s1670 + $0x28] sm:$0xff]
        %v1677 = vld [vmem:[%s1670 + $0x30] sm:$0xff]
        %v1678 = vld [vmem:[%s1670 + $0x38] sm:$0xff]
        %v1679 = vld [vmem:[%s1670 + $0x40] sm:$0xff]
        %v1680 = vld [vmem:[%s1670 + $0x48] sm:$0xff]
        %v1681 = vld [vmem:[%s1670 + $0x50] sm:$0xff]
        %v1682 = vld [vmem:[%s1670 + $0x58] sm:$0xff]
        %v1683 = vld [vmem:[%s1670 + $0x60] sm:$0xff]
        %v1684 = vld [vmem:[%s1670 + $0x68] sm:$0xff]
        %v1685 = vld [vmem:[%s1670 + $0x70] sm:$0xff]
        %v1686 = vld [vmem:[%s1670 + $0x78] sm:$0xff]
        %1687 = vmatpush.msra.mxu0 %v1686
        %1688 = vmatpush.msra.mxu0 %v1685
        %1689 = vmatpush.msra.mxu0 %v1684
        %1690 = vmatpush.msra.mxu0 %v1683
        %1691 = vmatpush.msra.mxu0 %v1682
        %1692 = vmatpush.msra.mxu0 %v1681
        %1693 = vmatpush.msra.mxu0 %v1680
        %1694 = vmatpush.msra.mxu0 %v1679
        %1695 = vmatpush.msra.mxu0 %v1678
        %1696 = vmatpush.msra.mxu0 %v1677
        %1697 = vmatpush.msra.mxu0 %v1676
        %1698 = vmatpush.msra.mxu0 %v1675
        %1699 = vmatpush.msra.mxu0 %v1674
        %1700 = vmatpush.msra.mxu0 %v1673
        %1701 = vmatpush.msra.mxu0 %v1672
        %1702 = vmatpush.msra.mxu0 %v1671
        %1703 = vmatmul.f32.gmra.mxu0 %v1662
        %v1704 = vpop.f32.mrf.mxu0
        %v1705 = vadd.f32 0.0, %v1704
        %1706 = vmatmul.f32.gmra.mxu0 %v1663
        %v1707 = vpop.f32.mrf.mxu0
        %v1708 = vadd.f32 0.0, %v1707
        %1709 = vmatmul.f32.gmra.mxu0 %v1664
        %v1710 = vpop.f32.mrf.mxu0
        %v1711 = vadd.f32 0.0, %v1710
        %1712 = vmatmul.f32.gmra.mxu0 %v1665
        %v1713 = vpop.f32.mrf.mxu0
        %v1714 = vadd.f32 0.0, %v1713
        %1715 = vmatmul.f32.gmra.mxu0 %v1666
        %v1716 = vpop.f32.mrf.mxu0
        %v1717 = vadd.f32 0.0, %v1716
        %1718 = vmatmul.f32.gmra.mxu0 %v1667
        %v1719 = vpop.f32.mrf.mxu0
        %v1720 = vadd.f32 0.0, %v1719
        %1721 = vmatmul.f32.gmra.mxu0 %v1668
        %v1722 = vpop.f32.mrf.mxu0
        %v1723 = vadd.f32 0.0, %v1722
        %1724 = vmatmul.f32.gmra.mxu0 %v1669
        %v1725 = vpop.f32.mrf.mxu0
        %v1726 = vadd.f32 0.0, %v1725
        %1727 = vdwg.mxu0
        %v1728 = vadd.f32 %v1654, %v1705
        %v1729 = vadd.f32 %v1655, %v1708
        %v1730 = vadd.f32 %v1656, %v1711
        %v1731 = vadd.f32 %v1657, %v1714
        %v1732 = vadd.f32 %v1658, %v1717
        %v1733 = vadd.f32 %v1659, %v1720
        %v1734 = vadd.f32 %v1660, %v1723
        %v1735 = vadd.f32 %v1661, %v1726
        %v1736 = vld [vmem:[%s898 + $0x9] sm:$0xff]
        %v1737 = vld [vmem:[%s898 + $0x11] sm:$0xff]
        %v1738 = vld [vmem:[%s898 + $0x29] sm:$0xff]
        %v1739 = vld [vmem:[%s898 + $0x31] sm:$0xff]
        %v1740 = vld [vmem:[%s898 + $0x49] sm:$0xff]
        %v1741 = vld [vmem:[%s898 + $0x51] sm:$0xff]
        %v1742 = vld [vmem:[%s898 + $0x69] sm:$0xff]
        %v1743 = vld [vmem:[%s898 + $0x71] sm:$0xff]
        %s1744 = scalar_lea.vmem [#allocation6], 1024
        %v1745 = vld [vmem:[%s1744] sm:$0xff]
        %v1746 = vld [vmem:[%s1744 + $0x8] sm:$0xff]
        %v1747 = vld [vmem:[%s1744 + $0x10] sm:$0xff]
        %v1748 = vld [vmem:[%s1744 + $0x18] sm:$0xff]
        %v1749 = vld [vmem:[%s1744 + $0x20] sm:$0xff]
        %v1750 = vld [vmem:[%s1744 + $0x28] sm:$0xff]
        %v1751 = vld [vmem:[%s1744 + $0x30] sm:$0xff]
        %v1752 = vld [vmem:[%s1744 + $0x38] sm:$0xff]
        %v1753 = vld [vmem:[%s1744 + $0x40] sm:$0xff]
        %v1754 = vld [vmem:[%s1744 + $0x48] sm:$0xff]
        %v1755 = vld [vmem:[%s1744 + $0x50] sm:$0xff]
        %v1756 = vld [vmem:[%s1744 + $0x58] sm:$0xff]
        %v1757 = vld [vmem:[%s1744 + $0x60] sm:$0xff]
        %v1758 = vld [vmem:[%s1744 + $0x68] sm:$0xff]
        %v1759 = vld [vmem:[%s1744 + $0x70] sm:$0xff]
        %v1760 = vld [vmem:[%s1744 + $0x78] sm:$0xff]
        %1761 = vmatpush.msra.mxu0 %v1760
        %1762 = vmatpush.msra.mxu0 %v1759
        %1763 = vmatpush.msra.mxu0 %v1758
        %1764 = vmatpush.msra.mxu0 %v1757
        %1765 = vmatpush.msra.mxu0 %v1756
        %1766 = vmatpush.msra.mxu0 %v1755
        %1767 = vmatpush.msra.mxu0 %v1754
        %1768 = vmatpush.msra.mxu0 %v1753
        %1769 = vmatpush.msra.mxu0 %v1752
        %1770 = vmatpush.msra.mxu0 %v1751
        %1771 = vmatpush.msra.mxu0 %v1750
        %1772 = vmatpush.msra.mxu0 %v1749
        %1773 = vmatpush.msra.mxu0 %v1748
        %1774 = vmatpush.msra.mxu0 %v1747
        %1775 = vmatpush.msra.mxu0 %v1746
        %1776 = vmatpush.msra.mxu0 %v1745
        %1777 = vmatmul.f32.gmra.mxu0 %v1736
        %v1778 = vpop.f32.mrf.mxu0
        %v1779 = vadd.f32 0.0, %v1778
        %1780 = vmatmul.f32.gmra.mxu0 %v1737
        %v1781 = vpop.f32.mrf.mxu0
        %v1782 = vadd.f32 0.0, %v1781
        %1783 = vmatmul.f32.gmra.mxu0 %v1738
        %v1784 = vpop.f32.mrf.mxu0
        %v1785 = vadd.f32 0.0, %v1784
        %1786 = vmatmul.f32.gmra.mxu0 %v1739
        %v1787 = vpop.f32.mrf.mxu0
        %v1788 = vadd.f32 0.0, %v1787
        %1789 = vmatmul.f32.gmra.mxu0 %v1740
        %v1790 = vpop.f32.mrf.mxu0
        %v1791 = vadd.f32 0.0, %v1790
        %1792 = vmatmul.f32.gmra.mxu0 %v1741
        %v1793 = vpop.f32.mrf.mxu0
        %v1794 = vadd.f32 0.0, %v1793
        %1795 = vmatmul.f32.gmra.mxu0 %v1742
        %v1796 = vpop.f32.mrf.mxu0
        %v1797 = vadd.f32 0.0, %v1796
        %1798 = vmatmul.f32.gmra.mxu0 %v1743
        %v1799 = vpop.f32.mrf.mxu0
        %v1800 = vadd.f32 0.0, %v1799
        %1801 = vdwg.mxu0
        %v1802 = vadd.f32 %v1728, %v1779
        %v1803 = vadd.f32 %v1729, %v1782
        %v1804 = vadd.f32 %v1730, %v1785
        %v1805 = vadd.f32 %v1731, %v1788
        %v1806 = vadd.f32 %v1732, %v1791
        %v1807 = vadd.f32 %v1733, %v1794
        %v1808 = vadd.f32 %v1734, %v1797
        %v1809 = vadd.f32 %v1735, %v1800
        %v1810 = vld [vmem:[%s7] sm:$0x1]
        %v1812 = vperm.slane %v1810, 0
        %v1814 = vmul.f32 %v1802, %v1812
        %v1815 = vmul.f32 %v1803, %v1812
        %v1816 = vmul.f32 %v1804, %v1812
        %v1817 = vmul.f32 %v1805, %v1812
        %v1818 = vmul.f32 %v1806, %v1812
        %v1819 = vmul.f32 %v1807, %v1812
        %v1820 = vmul.f32 %v1808, %v1812
        %v1821 = vmul.f32 %v1809, %v1812
        %v1822 = vld [vmem:[%s8] sm:$0x1]
        %v1824 = vperm.slane %v1822, 0
        %v1826 = vadd.f32 %v1814, %v1824
        %v1827 = vadd.f32 %v1815, %v1824
        %v1828 = vadd.f32 %v1816, %v1824
        %v1829 = vadd.f32 %v1817, %v1824
        %v1830 = vadd.f32 %v1818, %v1824
        %v1831 = vadd.f32 %v1819, %v1824
        %v1832 = vadd.f32 %v1820, %v1824
        %v1833 = vadd.f32 %v1821, %v1824
        %v1834 = vmax.f32 %v1826, 0.0
        %v1835 = vmax.f32 %v1827, 0.0
        %v1836 = vmax.f32 %v1828, 0.0
        %v1837 = vmax.f32 %v1829, 0.0
        %v1838 = vmax.f32 %v1830, 0.0
        %v1839 = vmax.f32 %v1831, 0.0
        %v1840 = vmax.f32 %v1832, 0.0
        %v1841 = vmax.f32 %v1833, 0.0
        %1842 = vst [vmem:[%s359] sm:$0xff] %v1834
        %1843 = vst [vmem:[%s359 + $0x8] sm:$0xff] %v1835
        %1844 = vst [vmem:[%s359 + $0x10] sm:$0xff] %v1836
        %1845 = vst [vmem:[%s359 + $0x18] sm:$0xff] %v1837
        %1846 = vst [vmem:[%s359 + $0x20] sm:$0xff] %v1838
        %1847 = vst [vmem:[%s359 + $0x28] sm:$0xff] %v1839
        %1848 = vst [vmem:[%s359 + $0x30] sm:$0xff] %v1840
        %1849 = vst [vmem:[%s359 + $0x38] sm:$0xff] %v1841
        %s1850 = sand.u32 %s227, 1
        %s1851 = scalar_lea.sflag [#allocation5], %s1850
        %s1852 = sand.u32 %s227, 1
        %s1853 = smul.addr %s1852, 64
        %s1854 = scalar_lea.vmem [#allocation8], %s1853
        // Predicated region
        $region65: #{tpu_custom_call.1} parent=55 // pred_check
          %p1855 = pneg %p237
        $region66: #{tpu_custom_call.1} parent=55 // pred_check_branch
          %1857 = sbr.rel (%p1855) target = $region68
        $region67: #{tpu_custom_call.1} parent=55 // pred_region
          %1859 = vsyncadd %s1851, 0
          %s1860 = smul.addr %s25, 8
          %s1861 = smul.addr %s1860, 8
          %s1862 = scalar_lea.hbm %s9, %s1861
          %s1863 = sshll.u32 %s1854, 4
          %s1864 = int_to_ptr.vmem [resolvable:$true] %s1863
          %s1865 = sshll.u32 %s1862, 4
          %s1866 = int_to_ptr.hbm [resolvable:$true] %s1865
          %1871 = dma.vmem_to_hbm [thread:$0]  %s1864, 1024, %s1866, %s1851, 128, 128, 8
        $region68: #{tpu_custom_call.1} parent=55 // pred_fallthru
          _
      $region56: #{tpu_custom_call.1} parent=5 // pred_fallthru
        _
      %p1872 = scmp.le.s32.totalorder 2, %s20
      // Predicated region
      $region69: #{tpu_custom_call.1} parent=5 // pred_check
        %p1873 = pneg %p1872
      $region70: #{tpu_custom_call.1} parent=5 // pred_check_branch
        %1875 = sbr.rel (%p1873) target = $region72
      $region71: #{tpu_custom_call.1} parent=5 // pred_region
        %s1876 = ssub.s32 %s20, 2
        // Predicated region
        $region73: #{tpu_custom_call.1} parent=71 // pred_check
          %p1877 = pneg %p243
        $region74: #{tpu_custom_call.1} parent=71 // pred_check_branch
          %1879 = sbr.rel (%p1877) target = $region76
        $region75: #{tpu_custom_call.1} parent=71 // pred_region
          %s1880 = sand.u32 %s228, 1
          %s1881 = scalar_lea.sflag [#allocation5], %s1880
          %s1882 = sand.u32 %s228, 1
          %s1883 = smul.addr %s1882, 64
          %s1884 = scalar_lea.vmem [#allocation8], %s1883
          %1886 = dma.done %s1881, 1024
        $region76: #{tpu_custom_call.1} parent=71 // pred_fallthru
          _
      $region72: #{tpu_custom_call.1} parent=5 // pred_fallthru
        _
    $region6: #{tpu_custom_call.1} parent=1 // loop_footer
      %s24 = sadd.s32 1, %s20
    $region7: #{tpu_custom_call.1} parent=1 // loop_footer_branch
      %19 = sbr.rel target = $region3
    $region8: #{tpu_custom_call.1} parent=1 // loop_exit
      _
    %1887 = vsyncpa [#allocation4], 1
    %s1888 = scalar_lea.sflag [#allocation4], 1
    %1889 = vsyncpa %s1888, 1
    %1890 = vsyncpa [#allocation7], 1
    %1891 = vsyncpa [#allocation5], 1
    %s1892 = scalar_lea.sflag [#allocation5], 1
    %1893 = vsyncpa %s1892, 1

</llo_original>
